<compile_context>
chip_gen: v7x
topology: tpu7x:2x2x1
jax: 0.10.0
libtpu: 0.0.40
codegen_flags: <defaults>
</compile_context>

<pallas_src>
import functools

import jax
import jax.numpy as jnp
from jax import lax
from jax.experimental import pallas as pl
from jax.experimental.pallas import tpu as pltpu


def _round_up(n, m):
    return ((n + m - 1) // m) * m


def _dynamics_kernel(x_ref, w0_ref, b0_ref, wr_ref, br_ref, state_ref, cols_ref,
                     *, num_blocks, seq_len, cin_pad, c_pad):
    """One grid step over `rows` = whole samples (rows % seq_len == 0).

    x_ref:     (rows, cin_pad)                bf16  channels-last, lane-padded
    w0_ref:    (3*cin_pad, c_pad)             bf16  stem im2col weights, BN folded
    b0_ref:    (1, c_pad)                     f32   stem BN shift
    wr_ref:    (n_wr, 3*c_pad, c_pad)         bf16  residual im2col weights
    br_ref:    (n_wr, 1, c_pad)               f32   residual BN shifts
    state_ref: (rows, c_pad)                  f32
    cols_ref:  (rows, 3*max(cin_pad, c_pad))  bf16  im2col scratch
    """
    M = x_ref.shape[0]
    L = seq_len

    # Boundary masks for the per-sample 'same' padding, built ONCE per grid
    # step at full lane width (JAX does not CSE broadcast_in_dim, so they are
    # hoisted here instead of being re-emitted inside every conv).
    def make_masks(width):
        pos = lax.broadcasted_iota(jnp.int32, (M, width), 0) % L
        not_first = (pos != 0).astype(jnp.float32)       # zero at t == 0
        not_last = (pos != L - 1).astype(jnp.float32)    # zero at t == L-1
        return not_first, not_last

    masks = {cin_pad: make_masks(cin_pad)}
    if c_pad not in masks:
        masks[c_pad] = make_masks(c_pad)

    def conv3(h, w, width):
        # h: (M, width) f32, w: (3*width, c_pad) bf16 -> (M, c_pad) f32.
        # Shifted taps via XLU sublane roll + boundary-mask multiply.  Every
        # block starts on a sample boundary, so the roll never leaks across
        # samples.  Roll/mask stay f32 (v5e has no bf16 VALU); the bf16 cast
        # happens only when writing the aligned im2col scratch slices that
        # feed a single MXU matmul with f32 accumulation.
        not_first, not_last = masks[width]
        prev = pltpu.roll(h, shift=1, axis=0) * not_first       # h[t-1]
        nxt = pltpu.roll(h, shift=M - 1, axis=0) * not_last     # h[t+1]
        cols_ref[:, 0:width] = prev.astype(jnp.bfloat16)
        cols_ref[:, width:2 * width] = h.astype(jnp.bfloat16)
        cols_ref[:, 2 * width:3 * width] = nxt.astype(jnp.bfloat16)
        return jnp.dot(cols_ref[:, 0:3 * width], w,
                       preferred_element_type=jnp.float32)

    # stem: conv -> (folded) bn -> relu.  x arrives as bf16, widened once.
    x = x_ref[...].astype(jnp.float32)
    y = jnp.maximum(conv3(x, w0_ref[...], cin_pad) + b0_ref[...], 0.0)

    # residual tower; skip path stays f32.
    def res_block(y, base):
        h = jnp.maximum(conv3(y, wr_ref[base], c_pad) + br_ref[base], 0.0)
        h = conv3(h, wr_ref[base + 1], c_pad) + br_ref[base + 1]
        return jnp.maximum(h + y, 0.0)

    if num_blocks <= 4:
        # Short tower: full unroll gives the LLO scheduler maximum visibility.
        for blk in range(num_blocks):
            y = res_block(y, 2 * blk)
    else:
        # Deep tower: fori_loop bounds vreg live ranges and code size; weights
        # are indexed dynamically along the leading (untiled) axis.
        y = lax.fori_loop(0, num_blocks, lambda i, y: res_block(y, 2 * i), y)

    state_ref[...] = y.astype(state_ref.dtype)


def _fold_bn(gamma, beta, mean, var, eps=1e-5):
    scale = gamma / jnp.sqrt(var + eps)
    shift = beta - mean * scale
    return jnp.stack([scale, shift], axis=0)               # (2, C)


def _pack_params(params, num_blocks):
    """Fold BN scale into conv weights, zero-pad channels to 128 lanes, and
    build im2col (3*Cin_pad, C_pad) bf16 weight slabs.  Padded lanes carry
    zero weights and zero shifts, so padded activations stay exactly zero."""
    w0 = params["w0"]            # (3, Cin, C) taps = (prev, center, next)
    bn0 = params["bn0"]          # (2, C)      rows = scale, shift
    _, cin, c = w0.shape
    cin_p = _round_up(cin, 128)
    c_p = _round_up(c, 128)

    w0f = w0 * bn0[0][None, None, :]
    w0p = jnp.zeros((3, cin_p, c_p), jnp.float32).at[:, :cin, :c].set(w0f)
    w0p = w0p.reshape(3 * cin_p, c_p).astype(jnp.bfloat16)
    b0p = jnp.zeros((1, c_p), jnp.float32).at[:, :c].set(bn0[1][None, :])

    if num_blocks > 0:
        wr = params["wr"].reshape(num_blocks, 2, 3, c, c)     # conv1 / conv2
        bnr = params["bnr"].reshape(num_blocks, 2, 2, c)      # (scale, shift)
        scale, shift = bnr[:, :, 0], bnr[:, :, 1]
        wrf = wr * scale[:, :, None, None, :]
        wrp = jnp.zeros((num_blocks, 2, 3, c_p, c_p), jnp.float32)
        wrp = wrp.at[:, :, :, :c, :c].set(wrf)
        wrp = wrp.reshape(2 * num_blocks, 3 * c_p, c_p).astype(jnp.bfloat16)
        brp = jnp.zeros((2 * num_blocks, 1, c_p), jnp.float32)
        brp = brp.at[:, 0, :c].set(shift.reshape(2 * num_blocks, c))
    else:
        # Dummy (unused) buffers so pallas_call never sees zero-size arrays.
        wrp = jnp.zeros((1, 3 * c_p, c_p), jnp.bfloat16)
        brp = jnp.zeros((1, 1, c_p), jnp.float32)
    return w0p, b0p, wrp, brp, cin_p, c_p


def _rows_per_block(batch, seq_len, target_rows):
    """Largest block <= target that (a) holds whole samples, (b) evenly
    divides B*L, and (c) keeps the sublane dim a multiple of 8 (or equals
    the full first dim)."""
    total = batch * seq_len
    if total <= target_rows:
        return total
    spb = max(1, target_rows // seq_len)        # samples per block
    while batch % spb:
        spb -= 1
    rows = spb * seq_len
    if rows % 8 != 0:                           # rare (odd L): fall back
        return total
    return rows


def dynamics_forward(x_ncl, params, *, num_blocks, target_rows=1024):
    """x_ncl: (B, num_channels + increase_channels, L) float32 — PyTorch NCL.

    Returns (state (B, num_channels, L), reward (B, 1)) like DynamicsNetwork.

    NOTE: the NCL <-> channels-last conversion below exists only for PyTorch
    API parity.  If this forward sits inside an MCTS / unroll loop, keep the
    model channels-last end-to-end and feed the (B*L, Cin_pad) bf16 rows
    directly — the kernel itself is layout-clean and lane-dense.
    """
    B, cin, L = x_ncl.shape
    c = params["w0"].shape[-1]

    w0p, b0p, wrp, brp, cin_p, c_p = _pack_params(params, num_blocks)
    n_wr = wrp.shape[0]

    # channels-last rows, zero-padded to 128 lanes, bf16 over HBM (half DMA).
    x_rows = jnp.zeros((B * L, cin_p), jnp.bfloat16)
    x_rows = x_rows.at[:, :cin].set(
        jnp.transpose(x_ncl, (0, 2, 1)).reshape(B * L, cin).astype(jnp.bfloat16))

    rows = _rows_per_block(B, L, target_rows)
    grid = (B * L // rows,)

    kernel = functools.partial(_dynamics_kernel, num_blocks=num_blocks,
                               seq_len=L, cin_pad=cin_p, c_pad=c_p)

    state_rows = pl.pallas_call(
        kernel,
        out_shape=jax.ShapeDtypeStruct((B * L, c_p), jnp.float32),
        grid_spec=pltpu.PrefetchScalarGridSpec(
            num_scalar_prefetch=0,
            grid=grid,
            in_specs=[
                # activations: tiled along the row axis -> pipelined DMA.
                pl.BlockSpec((rows, cin_p), lambda g: (g, 0)),
                # parameters: constant index_map -> fetched once, resident.
                # (For a scaled-up tower, add pipeline_mode=pl.Buffered(1)
                #  here to single-buffer the resident weights.)
                pl.BlockSpec((3 * cin_p, c_p), lambda g: (0, 0)),
                pl.BlockSpec((1, c_p), lambda g: (0, 0)),
                pl.BlockSpec((n_wr, 3 * c_p, c_p), lambda g: (0, 0, 0)),
                pl.BlockSpec((n_wr, 1, c_p), lambda g: (0, 0, 0)),
            ],
            out_specs=pl.BlockSpec((rows, c_p), lambda g: (g, 0)),
            scratch_shapes=[
                pltpu.VMEM((rows, 3 * max(cin_p, c_p)), jnp.bfloat16),
            ],
        ),
        compiler_params=pltpu.CompilerParams(
            dimension_semantics=("parallel",),
            # per-step live set at rows=1024, C_pad=128 is only a few MiB;
            # 32 MiB fits every generation's scoped budget (v5e default 16 MiB,
            # v7x physical 64 MiB).
            vmem_limit_bytes=32 * 1024 * 1024,
        ),
    )(x_rows, w0p, b0p, wrp, brp)

    # Padded lanes are exactly zero; slice + transpose back to PyTorch NCL.
    state = jnp.transpose(state_rows.reshape(B, L, c_p)[:, :, :c],
                          (0, 2, 1)).astype(x_ncl.dtype)
    # reward = torch.zeros(len(x), 1) — trivially zeros, produced in the glue.
    reward = jnp.zeros((B, 1), x_ncl.dtype)
    return state, reward


def init_params(key, num_channels, increase_channels, num_blocks):
    """Deterministic synthetic parameters (shapes match the PyTorch module)."""
    cin = num_channels + increase_channels
    c = num_channels
    ks = jax.random.split(key, 3 + 6 * num_blocks)
    ki = iter(ks)

    def conv_w(k, cin_, cout_):
        # stored as (3 taps, Cin, Cout); equals PyTorch (Cout, Cin, 3) transposed
        fan_in = cin_ * 3
        bound = 1.0 / jnp.sqrt(fan_in)
        return jax.random.uniform(k, (3, cin_, cout_), jnp.float32, -bound, bound)

    def bn(kg, kb):
        gamma = 1.0 + 0.1 * jax.random.normal(kg, (c,), jnp.float32)
        beta = 0.1 * jax.random.normal(kb, (c,), jnp.float32)
        mean = jnp.zeros((c,), jnp.float32)
        var = jnp.ones((c,), jnp.float32)
        return _fold_bn(gamma, beta, mean, var)

    w0 = conv_w(next(ki), cin, c)
    bn0 = bn(next(ki), next(ki))

    wr_list, bnr_list = [], []
    for _ in range(num_blocks):
        w1 = conv_w(next(ki), c, c)
        bn1 = bn(next(ki), next(ki))
        w2 = conv_w(next(ki), c, c)
        bn2 = bn(next(ki), next(ki))
        wr_list.append(jnp.concatenate([w1, w2], axis=0))        # (6, C, C)
        bnr_list.append(jnp.concatenate([bn1, bn2], axis=0))     # (4, C)

    return {
        "w0": w0,
        "bn0": bn0,
        "wr": jnp.stack(wr_list, axis=0),                        # (nb, 6, C, C)
        "bnr": jnp.stack(bnr_list, axis=0),                      # (nb, 4, C)
    }


def _reference_forward(x_ncl, params, num_blocks):
    """Pure-JAX reference (lax.conv, f32) for correctness checking."""
    def conv(x, w_taps):  # w_taps: (3, Cin, Cout) -> PyTorch (Cout, Cin, 3)
        w = jnp.transpose(w_taps, (2, 1, 0))
        return lax.conv_general_dilated(
            x, w, window_strides=(1,), padding=((1, 1),),
            dimension_numbers=("NCH", "OIH", "NCH"))

    def bn_apply(x, bn):  # bn: (2, C) scale/shift, x: (B, C, L)
        return x * bn[0][None, :, None] + bn[1][None, :, None]

    y = jax.nn.relu(bn_apply(conv(x_ncl, params["w0"]), params["bn0"]))
    for blk in range(num_blocks):
        h = jax.nn.relu(bn_apply(conv(y, params["wr"][blk, 0:3]),
                                 params["bnr"][blk, 0:2]))
        h = bn_apply(conv(h, params["wr"][blk, 3:6]), params["bnr"][blk, 2:4])
        y = jax.nn.relu(h + y)
    return y, jnp.zeros((x_ncl.shape[0], 1), x_ncl.dtype)


if __name__ == "__main__":
    # Small shapes consistent with the module's forward.  target_rows=32 gives
    # a 2-step grid (2 samples per block), exercising the tiled/pipelined path
    # and the cross-block sample-boundary halo handling.
    B = 4
    num_channels = 32
    increase_channels = 4
    L = 16
    num_blocks = 2

    key = jax.random.PRNGKey(0)
    kx, kp = jax.random.split(key)
    x = jax.random.normal(kx, (B, num_channels + increase_channels, L),
                          jnp.float32)
    params = init_params(kp, num_channels, increase_channels, num_blocks)

    state, reward = dynamics_forward(x, params, num_blocks=num_blocks,
                                     target_rows=32)
    state = jax.block_until_ready(state)
    reward = jax.block_until_ready(reward)

    # Correctness check against a pure-JAX f32 reference.  Tolerance accounts
    # for the bf16 MXU operands (accumulation stays f32, skip path f32).
    ref_state, ref_reward = _reference_forward(x, params, num_blocks)
    assert state.shape == (B, num_channels, L)
    assert reward.shape == (B, 1)
    max_err = float(jnp.max(jnp.abs(state - ref_state)))
    assert jnp.allclose(state, ref_state, atol=3e-2, rtol=3e-2), max_err
    assert jnp.allclose(reward, ref_reward)

    print("KERNEL_OK")
</pallas_src>

<mosaic_0001>
module attributes {stable_mosaic.version = 11 : i64} {
  func.func @_dynamics_kernel(%arg0: i32, %arg1: memref<32x128xbf16, #tpu.memory_space<vmem>>, %arg2: memref<384x128xbf16, #tpu.memory_space<vmem>>, %arg3: memref<1x128xf32, #tpu.memory_space<vmem>>, %arg4: memref<4x384x128xbf16, #tpu.memory_space<vmem>>, %arg5: memref<4x1x128xf32, #tpu.memory_space<vmem>>, %arg6: memref<32x128xf32, #tpu.memory_space<vmem>>, %arg7: memref<32x384xbf16, #tpu.memory_space<vmem>>) attributes {dimension_semantics = [#tpu.dimension_semantics<parallel>], iteration_bounds = array<i64: 2>, scalar_prefetch = 0 : i64, scratch_operands = 1 : i64, tpu.core_type = #tpu.core_type<tc>, window_params = [{transform_indices = @transform_0, window_bounds = array<i64: 32, 128>}, {pipeline_mode = #tpu.pipeline_mode<synchronous>, transform_indices = @transform_1, window_bounds = array<i64: 384, 128>}, {pipeline_mode = #tpu.pipeline_mode<synchronous>, transform_indices = @transform_2, window_bounds = array<i64: 1, 128>}, {pipeline_mode = #tpu.pipeline_mode<synchronous>, transform_indices = @transform_3, window_bounds = array<i64: 4, 384, 128>}, {pipeline_mode = #tpu.pipeline_mode<synchronous>, transform_indices = @transform_4, window_bounds = array<i64: 4, 1, 128>}, {transform_indices = @transform_5, window_bounds = array<i64: 32, 128>}]} {
    %0 = tpu.iota {dimensions = array<i32: 0>} : vector<32x128xi32>
    %c16_i32 = arith.constant 16 : i32
    %c0_i32 = arith.constant 0 : i32
    %1 = arith.cmpi eq, %c16_i32, %c0_i32 : i32
    %c1_i32 = arith.constant 1 : i32
    %2 = arith.select %1, %c1_i32, %c16_i32 : i32
    %3 = vector.broadcast %2 : i32 to vector<32x128xi32>
    %4 = arith.remsi %0, %3 : vector<32x128xi32>
    %c0_i32_0 = arith.constant 0 : i32
    %5 = vector.broadcast %c0_i32_0 : i32 to vector<32x128xi32>
    %6 = arith.cmpi ne, %4, %5 : vector<32x128xi32>
    %c0_i32_1 = arith.constant 0 : i32
    %7 = vector.broadcast %c0_i32_1 : i32 to vector<32x128xi32>
    %8 = arith.cmpi slt, %4, %7 : vector<32x128xi32>
    %c0_i32_2 = arith.constant 0 : i32
    %9 = arith.cmpi slt, %2, %c0_i32_2 : i32
    %10 = vector.broadcast %9 : i1 to vector<32x128xi1>
    %11 = vector.broadcast %10 : vector<32x128xi1> to vector<32x128xi1>
    %12 = arith.xori %8, %11 : vector<32x128xi1>
    %13 = arith.andi %12, %6 : vector<32x128xi1>
    %14 = vector.broadcast %2 : i32 to vector<32x128xi32>
    %15 = arith.addi %4, %14 : vector<32x128xi32>
    %16 = arith.select %13, %15, %4 : vector<32x128xi1>, vector<32x128xi32>
    %c0_i32_3 = arith.constant 0 : i32
    %17 = vector.broadcast %c0_i32_3 : i32 to vector<32x128xi32>
    %18 = arith.cmpi ne, %16, %17 : vector<32x128xi32>
    %19 = arith.extui %18 : vector<32x128xi1> to vector<32x128xi32>
    %20 = arith.sitofp %19 : vector<32x128xi32> to vector<32x128xf32>
    %c15_i32 = arith.constant 15 : i32
    %21 = vector.broadcast %c15_i32 : i32 to vector<32x128xi32>
    %22 = arith.cmpi ne, %16, %21 : vector<32x128xi32>
    %23 = arith.extui %22 : vector<32x128xi1> to vector<32x128xi32>
    %24 = arith.sitofp %23 : vector<32x128xi32> to vector<32x128xf32>
    %c0 = arith.constant 0 : index
    %c0_4 = arith.constant 0 : index
    %25 = vector.load %arg1[%c0, %c0_4] : memref<32x128xbf16, #tpu.memory_space<vmem>>, vector<32x128xbf16>
    %26 = arith.extf %25 : vector<32x128xbf16> to vector<32x128xf32>
    %c0_5 = arith.constant 0 : index
    %c0_6 = arith.constant 0 : index
    %27 = vector.load %arg2[%c0_5, %c0_6] : memref<384x128xbf16, #tpu.memory_space<vmem>>, vector<384x128xbf16>
    %c1_i32_7 = arith.constant 1 : i32
    %28 = tpu.dynamic_rotate %26 by %c1_i32_7 dim 0 : vector<32x128xf32>, i32 -> vector<32x128xf32>
    %29 = arith.mulf %28, %20 : vector<32x128xf32>
    %c31_i32 = arith.constant 31 : i32
    %30 = tpu.dynamic_rotate %26 by %c31_i32 dim 0 : vector<32x128xf32>, i32 -> vector<32x128xf32>
    %31 = arith.mulf %30, %24 : vector<32x128xf32>
    %32 = arith.truncf %29 : vector<32x128xf32> to vector<32x128xbf16>
    %c0_8 = arith.constant 0 : index
    %c0_9 = arith.constant 0 : index
    %33 = vector.load %arg7[%c0_8, %c0_9] : memref<32x384xbf16, #tpu.memory_space<vmem>>, vector<32x128xbf16>
    tpu.vector_store %arg7[%c0_8, %c0_9], %32 {strides = array<i32>} : memref<32x384xbf16, #tpu.memory_space<vmem>>, vector<32x128xbf16>,
    %34 = arith.truncf %26 : vector<32x128xf32> to vector<32x128xbf16>
    %c0_10 = arith.constant 0 : index
    %c128 = arith.constant 128 : index
    %35 = vector.load %arg7[%c0_10, %c128] : memref<32x384xbf16, #tpu.memory_space<vmem>>, vector<32x128xbf16>
    tpu.vector_store %arg7[%c0_10, %c128], %34 {strides = array<i32>} : memref<32x384xbf16, #tpu.memory_space<vmem>>, vector<32x128xbf16>,
    %36 = arith.truncf %31 : vector<32x128xf32> to vector<32x128xbf16>
    %c0_11 = arith.constant 0 : index
    %c256 = arith.constant 256 : index
    %37 = vector.load %arg7[%c0_11, %c256] : memref<32x384xbf16, #tpu.memory_space<vmem>>, vector<32x128xbf16>
    tpu.vector_store %arg7[%c0_11, %c256], %36 {strides = array<i32>} : memref<32x384xbf16, #tpu.memory_space<vmem>>, vector<32x128xbf16>,
    %c0_12 = arith.constant 0 : index
    %c0_13 = arith.constant 0 : index
    %38 = vector.load %arg7[%c0_12, %c0_13] : memref<32x384xbf16, #tpu.memory_space<vmem>>, vector<32x384xbf16>
    %cst = arith.constant dense<0.000000e+00> : vector<32x128xf32>
    %39 = tpu.matmul %38, %27, %cst {dimension_numbers = #tpu.dot_dimension_numbers<[1], [0], [0], [1], [0, 0, 1, 1], [], []>} : vector<32x384xbf16>, vector<384x128xbf16>, vector<32x128xf32> -> vector<32x128xf32>
    %c0_14 = arith.constant 0 : index
    %c0_15 = arith.constant 0 : index
    %40 = vector.load %arg3[%c0_14, %c0_15] : memref<1x128xf32, #tpu.memory_space<vmem>>, vector<1x128xf32>
    %41 = vector.broadcast %40 : vector<1x128xf32> to vector<32x128xf32>
    %42 = arith.addf %39, %41 : vector<32x128xf32>
    %cst_16 = arith.constant 0.000000e+00 : f32
    %43 = vector.broadcast %cst_16 : f32 to vector<32x128xf32>
    %44 = arith.maximumf %42, %43 : vector<32x128xf32>
    %c0_17 = arith.constant 0 : index
    %c0_18 = arith.constant 0 : index
    %c0_19 = arith.constant 0 : index
    %45 = vector.load %arg4[%c0_17, %c0_18, %c0_19] : memref<4x384x128xbf16, #tpu.memory_space<vmem>>, vector<1x384x128xbf16>
    %46 = vector.shape_cast %45 : vector<1x384x128xbf16> to vector<384x128xbf16>
    %c1_i32_20 = arith.constant 1 : i32
    %47 = tpu.dynamic_rotate %44 by %c1_i32_20 dim 0 : vector<32x128xf32>, i32 -> vector<32x128xf32>
    %48 = arith.mulf %47, %20 : vector<32x128xf32>
    %c31_i32_21 = arith.constant 31 : i32
    %49 = tpu.dynamic_rotate %44 by %c31_i32_21 dim 0 : vector<32x128xf32>, i32 -> vector<32x128xf32>
    %50 = arith.mulf %49, %24 : vector<32x128xf32>
    %51 = arith.truncf %48 : vector<32x128xf32> to vector<32x128xbf16>
    %c0_22 = arith.constant 0 : index
    %c0_23 = arith.constant 0 : index
    %52 = vector.load %arg7[%c0_22, %c0_23] : memref<32x384xbf16, #tpu.memory_space<vmem>>, vector<32x128xbf16>
    tpu.vector_store %arg7[%c0_22, %c0_23], %51 {strides = array<i32>} : memref<32x384xbf16, #tpu.memory_space<vmem>>, vector<32x128xbf16>,
    %53 = arith.truncf %44 : vector<32x128xf32> to vector<32x128xbf16>
    %c0_24 = arith.constant 0 : index
    %c128_25 = arith.constant 128 : index
    %54 = vector.load %arg7[%c0_24, %c128_25] : memref<32x384xbf16, #tpu.memory_space<vmem>>, vector<32x128xbf16>
    tpu.vector_store %arg7[%c0_24, %c128_25], %53 {strides = array<i32>} : memref<32x384xbf16, #tpu.memory_space<vmem>>, vector<32x128xbf16>,
    %55 = arith.truncf %50 : vector<32x128xf32> to vector<32x128xbf16>
    %c0_26 = arith.constant 0 : index
    %c256_27 = arith.constant 256 : index
    %56 = vector.load %arg7[%c0_26, %c256_27] : memref<32x384xbf16, #tpu.memory_space<vmem>>, vector<32x128xbf16>
    tpu.vector_store %arg7[%c0_26, %c256_27], %55 {strides = array<i32>} : memref<32x384xbf16, #tpu.memory_space<vmem>>, vector<32x128xbf16>,
    %c0_28 = arith.constant 0 : index
    %c0_29 = arith.constant 0 : index
    %57 = vector.load %arg7[%c0_28, %c0_29] : memref<32x384xbf16, #tpu.memory_space<vmem>>, vector<32x384xbf16>
    %cst_30 = arith.constant dense<0.000000e+00> : vector<32x128xf32>
    %58 = tpu.matmul %57, %46, %cst_30 {dimension_numbers = #tpu.dot_dimension_numbers<[1], [0], [0], [1], [0, 0, 1, 1], [], []>} : vector<32x384xbf16>, vector<384x128xbf16>, vector<32x128xf32> -> vector<32x128xf32>
    %c0_31 = arith.constant 0 : index
    %c0_32 = arith.constant 0 : index
    %c0_33 = arith.constant 0 : index
    %59 = vector.load %arg5[%c0_31, %c0_32, %c0_33] : memref<4x1x128xf32, #tpu.memory_space<vmem>>, vector<1x1x128xf32>
    %60 = vector.shape_cast %59 : vector<1x1x128xf32> to vector<1x128xf32>
    %61 = vector.broadcast %60 : vector<1x128xf32> to vector<32x128xf32>
    %62 = arith.addf %58, %61 : vector<32x128xf32>
    %cst_34 = arith.constant 0.000000e+00 : f32
    %63 = vector.broadcast %cst_34 : f32 to vector<32x128xf32>
    %64 = arith.maximumf %62, %63 : vector<32x128xf32>
    %c1 = arith.constant 1 : index
    %c0_35 = arith.constant 0 : index
    %c0_36 = arith.constant 0 : index
    %65 = vector.load %arg4[%c1, %c0_35, %c0_36] : memref<4x384x128xbf16, #tpu.memory_space<vmem>>, vector<1x384x128xbf16>
    %66 = vector.shape_cast %65 : vector<1x384x128xbf16> to vector<384x128xbf16>
    %c1_i32_37 = arith.constant 1 : i32
    %67 = tpu.dynamic_rotate %64 by %c1_i32_37 dim 0 : vector<32x128xf32>, i32 -> vector<32x128xf32>
    %68 = arith.mulf %67, %20 : vector<32x128xf32>
    %c31_i32_38 = arith.constant 31 : i32
    %69 = tpu.dynamic_rotate %64 by %c31_i32_38 dim 0 : vector<32x128xf32>, i32 -> vector<32x128xf32>
    %70 = arith.mulf %69, %24 : vector<32x128xf32>
    %71 = arith.truncf %68 : vector<32x128xf32> to vector<32x128xbf16>
    %c0_39 = arith.constant 0 : index
    %c0_40 = arith.constant 0 : index
    %72 = vector.load %arg7[%c0_39, %c0_40] : memref<32x384xbf16, #tpu.memory_space<vmem>>, vector<32x128xbf16>
    tpu.vector_store %arg7[%c0_39, %c0_40], %71 {strides = array<i32>} : memref<32x384xbf16, #tpu.memory_space<vmem>>, vector<32x128xbf16>,
    %73 = arith.truncf %64 : vector<32x128xf32> to vector<32x128xbf16>
    %c0_41 = arith.constant 0 : index
    %c128_42 = arith.constant 128 : index
    %74 = vector.load %arg7[%c0_41, %c128_42] : memref<32x384xbf16, #tpu.memory_space<vmem>>, vector<32x128xbf16>
    tpu.vector_store %arg7[%c0_41, %c128_42], %73 {strides = array<i32>} : memref<32x384xbf16, #tpu.memory_space<vmem>>, vector<32x128xbf16>,
    %75 = arith.truncf %70 : vector<32x128xf32> to vector<32x128xbf16>
    %c0_43 = arith.constant 0 : index
    %c256_44 = arith.constant 256 : index
    %76 = vector.load %arg7[%c0_43, %c256_44] : memref<32x384xbf16, #tpu.memory_space<vmem>>, vector<32x128xbf16>
    tpu.vector_store %arg7[%c0_43, %c256_44], %75 {strides = array<i32>} : memref<32x384xbf16, #tpu.memory_space<vmem>>, vector<32x128xbf16>,
    %c0_45 = arith.constant 0 : index
    %c0_46 = arith.constant 0 : index
    %77 = vector.load %arg7[%c0_45, %c0_46] : memref<32x384xbf16, #tpu.memory_space<vmem>>, vector<32x384xbf16>
    %cst_47 = arith.constant dense<0.000000e+00> : vector<32x128xf32>
    %78 = tpu.matmul %77, %66, %cst_47 {dimension_numbers = #tpu.dot_dimension_numbers<[1], [0], [0], [1], [0, 0, 1, 1], [], []>} : vector<32x384xbf16>, vector<384x128xbf16>, vector<32x128xf32> -> vector<32x128xf32>
    %c1_48 = arith.constant 1 : index
    %c0_49 = arith.constant 0 : index
    %c0_50 = arith.constant 0 : index
    %79 = vector.load %arg5[%c1_48, %c0_49, %c0_50] : memref<4x1x128xf32, #tpu.memory_space<vmem>>, vector<1x1x128xf32>
    %80 = vector.shape_cast %79 : vector<1x1x128xf32> to vector<1x128xf32>
    %81 = vector.broadcast %80 : vector<1x128xf32> to vector<32x128xf32>
    %82 = arith.addf %78, %81 : vector<32x128xf32>
    %83 = arith.addf %82, %44 : vector<32x128xf32>
    %cst_51 = arith.constant 0.000000e+00 : f32
    %84 = vector.broadcast %cst_51 : f32 to vector<32x128xf32>
    %85 = arith.maximumf %83, %84 : vector<32x128xf32>
    %c2 = arith.constant 2 : index
    %c0_52 = arith.constant 0 : index
    %c0_53 = arith.constant 0 : index
    %86 = vector.load %arg4[%c2, %c0_52, %c0_53] : memref<4x384x128xbf16, #tpu.memory_space<vmem>>, vector<1x384x128xbf16>
    %87 = vector.shape_cast %86 : vector<1x384x128xbf16> to vector<384x128xbf16>
    %c1_i32_54 = arith.constant 1 : i32
    %88 = tpu.dynamic_rotate %85 by %c1_i32_54 dim 0 : vector<32x128xf32>, i32 -> vector<32x128xf32>
    %89 = arith.mulf %88, %20 : vector<32x128xf32>
    %c31_i32_55 = arith.constant 31 : i32
    %90 = tpu.dynamic_rotate %85 by %c31_i32_55 dim 0 : vector<32x128xf32>, i32 -> vector<32x128xf32>
    %91 = arith.mulf %90, %24 : vector<32x128xf32>
    %92 = arith.truncf %89 : vector<32x128xf32> to vector<32x128xbf16>
    %c0_56 = arith.constant 0 : index
    %c0_57 = arith.constant 0 : index
    %93 = vector.load %arg7[%c0_56, %c0_57] : memref<32x384xbf16, #tpu.memory_space<vmem>>, vector<32x128xbf16>
    tpu.vector_store %arg7[%c0_56, %c0_57], %92 {strides = array<i32>} : memref<32x384xbf16, #tpu.memory_space<vmem>>, vector<32x128xbf16>,
    %94 = arith.truncf %85 : vector<32x128xf32> to vector<32x128xbf16>
    %c0_58 = arith.constant 0 : index
    %c128_59 = arith.constant 128 : index
    %95 = vector.load %arg7[%c0_58, %c128_59] : memref<32x384xbf16, #tpu.memory_space<vmem>>, vector<32x128xbf16>
    tpu.vector_store %arg7[%c0_58, %c128_59], %94 {strides = array<i32>} : memref<32x384xbf16, #tpu.memory_space<vmem>>, vector<32x128xbf16>,
    %96 = arith.truncf %91 : vector<32x128xf32> to vector<32x128xbf16>
    %c0_60 = arith.constant 0 : index
    %c256_61 = arith.constant 256 : index
    %97 = vector.load %arg7[%c0_60, %c256_61] : memref<32x384xbf16, #tpu.memory_space<vmem>>, vector<32x128xbf16>
    tpu.vector_store %arg7[%c0_60, %c256_61], %96 {strides = array<i32>} : memref<32x384xbf16, #tpu.memory_space<vmem>>, vector<32x128xbf16>,
    %c0_62 = arith.constant 0 : index
    %c0_63 = arith.constant 0 : index
    %98 = vector.load %arg7[%c0_62, %c0_63] : memref<32x384xbf16, #tpu.memory_space<vmem>>, vector<32x384xbf16>
    %cst_64 = arith.constant dense<0.000000e+00> : vector<32x128xf32>
    %99 = tpu.matmul %98, %87, %cst_64 {dimension_numbers = #tpu.dot_dimension_numbers<[1], [0], [0], [1], [0, 0, 1, 1], [], []>} : vector<32x384xbf16>, vector<384x128xbf16>, vector<32x128xf32> -> vector<32x128xf32>
    %c2_65 = arith.constant 2 : index
    %c0_66 = arith.constant 0 : index
    %c0_67 = arith.constant 0 : index
    %100 = vector.load %arg5[%c2_65, %c0_66, %c0_67] : memref<4x1x128xf32, #tpu.memory_space<vmem>>, vector<1x1x128xf32>
    %101 = vector.shape_cast %100 : vector<1x1x128xf32> to vector<1x128xf32>
    %102 = vector.broadcast %101 : vector<1x128xf32> to vector<32x128xf32>
    %103 = arith.addf %99, %102 : vector<32x128xf32>
    %cst_68 = arith.constant 0.000000e+00 : f32
    %104 = vector.broadcast %cst_68 : f32 to vector<32x128xf32>
    %105 = arith.maximumf %103, %104 : vector<32x128xf32>
    %c3 = arith.constant 3 : index
    %c0_69 = arith.constant 0 : index
    %c0_70 = arith.constant 0 : index
    %106 = vector.load %arg4[%c3, %c0_69, %c0_70] : memref<4x384x128xbf16, #tpu.memory_space<vmem>>, vector<1x384x128xbf16>
    %107 = vector.shape_cast %106 : vector<1x384x128xbf16> to vector<384x128xbf16>
    %c1_i32_71 = arith.constant 1 : i32
    %108 = tpu.dynamic_rotate %105 by %c1_i32_71 dim 0 : vector<32x128xf32>, i32 -> vector<32x128xf32>
    %109 = arith.mulf %108, %20 : vector<32x128xf32>
    %c31_i32_72 = arith.constant 31 : i32
    %110 = tpu.dynamic_rotate %105 by %c31_i32_72 dim 0 : vector<32x128xf32>, i32 -> vector<32x128xf32>
    %111 = arith.mulf %110, %24 : vector<32x128xf32>
    %112 = arith.truncf %109 : vector<32x128xf32> to vector<32x128xbf16>
    %c0_73 = arith.constant 0 : index
    %c0_74 = arith.constant 0 : index
    %113 = vector.load %arg7[%c0_73, %c0_74] : memref<32x384xbf16, #tpu.memory_space<vmem>>, vector<32x128xbf16>
    tpu.vector_store %arg7[%c0_73, %c0_74], %112 {strides = array<i32>} : memref<32x384xbf16, #tpu.memory_space<vmem>>, vector<32x128xbf16>,
    %114 = arith.truncf %105 : vector<32x128xf32> to vector<32x128xbf16>
    %c0_75 = arith.constant 0 : index
    %c128_76 = arith.constant 128 : index
    %115 = vector.load %arg7[%c0_75, %c128_76] : memref<32x384xbf16, #tpu.memory_space<vmem>>, vector<32x128xbf16>
    tpu.vector_store %arg7[%c0_75, %c128_76], %114 {strides = array<i32>} : memref<32x384xbf16, #tpu.memory_space<vmem>>, vector<32x128xbf16>,
    %116 = arith.truncf %111 : vector<32x128xf32> to vector<32x128xbf16>
    %c0_77 = arith.constant 0 : index
    %c256_78 = arith.constant 256 : index
    %117 = vector.load %arg7[%c0_77, %c256_78] : memref<32x384xbf16, #tpu.memory_space<vmem>>, vector<32x128xbf16>
    tpu.vector_store %arg7[%c0_77, %c256_78], %116 {strides = array<i32>} : memref<32x384xbf16, #tpu.memory_space<vmem>>, vector<32x128xbf16>,
    %c0_79 = arith.constant 0 : index
    %c0_80 = arith.constant 0 : index
    %118 = vector.load %arg7[%c0_79, %c0_80] : memref<32x384xbf16, #tpu.memory_space<vmem>>, vector<32x384xbf16>
    %cst_81 = arith.constant dense<0.000000e+00> : vector<32x128xf32>
    %119 = tpu.matmul %118, %107, %cst_81 {dimension_numbers = #tpu.dot_dimension_numbers<[1], [0], [0], [1], [0, 0, 1, 1], [], []>} : vector<32x384xbf16>, vector<384x128xbf16>, vector<32x128xf32> -> vector<32x128xf32>
    %c3_82 = arith.constant 3 : index
    %c0_83 = arith.constant 0 : index
    %c0_84 = arith.constant 0 : index
    %120 = vector.load %arg5[%c3_82, %c0_83, %c0_84] : memref<4x1x128xf32, #tpu.memory_space<vmem>>, vector<1x1x128xf32>
    %121 = vector.shape_cast %120 : vector<1x1x128xf32> to vector<1x128xf32>
    %122 = vector.broadcast %121 : vector<1x128xf32> to vector<32x128xf32>
    %123 = arith.addf %119, %122 : vector<32x128xf32>
    %124 = arith.addf %123, %85 : vector<32x128xf32>
    %cst_85 = arith.constant 0.000000e+00 : f32
    %125 = vector.broadcast %cst_85 : f32 to vector<32x128xf32>
    %126 = arith.maximumf %124, %125 : vector<32x128xf32>
    %c0_86 = arith.constant 0 : index
    %c0_87 = arith.constant 0 : index
    %127 = vector.load %arg6[%c0_86, %c0_87] : memref<32x128xf32, #tpu.memory_space<vmem>>, vector<32x128xf32>
    tpu.vector_store %arg6[%c0_86, %c0_87], %126 {strides = array<i32>} : memref<32x128xf32, #tpu.memory_space<vmem>>, vector<32x128xf32>,
    return
  }
  func.func @transform_0(%arg0: i32) -> (i32, i32) {
    %c0_i32 = arith.constant 0 : i32
    %c0_i32_0 = arith.constant 0 : i32
    return %arg0, %c0_i32 : i32, i32
  }
  func.func @transform_1(%arg0: i32) -> (i32, i32) {
    %c0_i32 = arith.constant 0 : i32
    %c0_i32_0 = arith.constant 0 : i32
    %c0_i32_1 = arith.constant 0 : i32
    return %c0_i32, %c0_i32_0 : i32, i32
  }
  func.func @transform_2(%arg0: i32) -> (i32, i32) {
    %c0_i32 = arith.constant 0 : i32
    %c0_i32_0 = arith.constant 0 : i32
    %c0_i32_1 = arith.constant 0 : i32
    return %c0_i32, %c0_i32_0 : i32, i32
  }
  func.func @transform_3(%arg0: i32) -> (i32, i32, i32) {
    %c0_i32 = arith.constant 0 : i32
    %c0_i32_0 = arith.constant 0 : i32
    %c0_i32_1 = arith.constant 0 : i32
    %c0_i32_2 = arith.constant 0 : i32
    return %c0_i32, %c0_i32_0, %c0_i32_1 : i32, i32, i32
  }
  func.func @transform_4(%arg0: i32) -> (i32, i32, i32) {
    %c0_i32 = arith.constant 0 : i32
    %c0_i32_0 = arith.constant 0 : i32
    %c0_i32_1 = arith.constant 0 : i32
    %c0_i32_2 = arith.constant 0 : i32
    return %c0_i32, %c0_i32_0, %c0_i32_1 : i32, i32, i32
  }
  func.func @transform_5(%arg0: i32) -> (i32, i32) {
    %c0_i32 = arith.constant 0 : i32
    %c0_i32_0 = arith.constant 0 : i32
    return %arg0, %c0_i32 : i32, i32
  }
}

</mosaic_0001>

<llo_original>
// kernel: tpu_custom_call.1
$region0: #{tpu_custom_call.1}
  #allocation0 [shape = 'u32[]', space=smem, size = 0x4, offset = 0x4, fixed_abs, tag = 'smem constant byte address 0x4 - core index']
  #allocation1 [shape = 'u32[144,128]{1,0:T(1,128)}', space=vmem, size = 0x12000, scoped, tag = 'internal scratch']
  #allocation2 [shape = 'bf16[32,384]{1,0:T(16,128)(2,1)}', space=vmem, size = 0x6000, scoped, tag = 'scratch operand']
  %s0 = inlined_call_operand.hbm [shape: bf16[64,128], index: 0, kind: input, shape index: {}]
  %s1 = inlined_call_operand.hbm [shape: bf16[384,128], index: 1, kind: input, shape index: {}]
  %s2 = inlined_call_operand.vmem [shape: f32[1,128], index: 2, kind: input, shape index: {}]
  %s3 = inlined_call_operand.hbm [shape: bf16[4,384,128], index: 3, kind: input, shape index: {}]
  %s4 = inlined_call_operand.vmem [shape: f32[4,1,128], index: 4, kind: input, shape index: {}]
  %s5 = inlined_call_operand.hbm [shape: f32[64,128], index: 5, kind: output, shape index: {}]
  %s6 = sld [smem:[#allocation0]]
  $region65: #{tpu_custom_call.1} parent=0
    _
  %s8 = ssub.s32 1, %s6
  %s9 = scalar_select 0, %s8, %s6
  $region1: #{tpu_custom_call.1} parent=0
    #allocation3 [shape = 'u8[16384]{0}', space=vmem, size = 0x4000, scoped, tag = 'input window, operand 0']
    #allocation4 [shape = 's32[2]{0}', space=sflag, size = 0x8, scoped, tag = 'scoped memory for tpu_custom_call.1']
    #allocation5 [shape = 's32[2]{0}', space=sflag, size = 0x8, scoped, tag = 'scoped memory for tpu_custom_call.1']
    #allocation6 [shape = 'u8[98304]{0}', space=vmem, size = 0x18000, scoped, tag = 'input window, operand 1, single buffered']
    #allocation7 [shape = 's32[1]{0}', space=sflag, size = 0x4, scoped, tag = 'scoped memory for tpu_custom_call.1']
    #allocation8 [shape = 'u8[393216]{0}', space=vmem, size = 0x60000, scoped, tag = 'input window, operand 3, single buffered']
    #allocation9 [shape = 'u8[32768]{0}', space=vmem, size = 0x8000, scoped, tag = 'output window, operand 0']
    %10 = vsyncpa [#allocation4], 0
    %s11 = scalar_lea.sflag [#allocation4], 1
    %12 = vsyncpa %s11, 0
    %13 = vsyncpa [#allocation7], 0
    %14 = vsyncpa [#allocation5], 0
    %s15 = scalar_lea.sflag [#allocation5], 1
    %16 = vsyncpa %s15, 0
    loop: start=0, step=1, limit=4
    $region2: #{tpu_custom_call.1} parent=1 // loop_pre_header
      _
    $region3: #{tpu_custom_call.1} parent=1 // loop_header
      %s18 = sphi 0, %s22
      %p19 = scmp.ge.s32.totalorder %s18, 4
      %s28 = sphi 0, %s30
      %s31 = sphi 0, %s28
      %s32 = sphi 0, %s31
      %s48 = sphi 0, %s32
      %s52 = sphi 0, %s52
      %s54 = sphi 0, %s52
      %s55 = sphi 0, %s54
      %s69 = sphi 0, %s55
      %s73 = sphi 0, %s73
      %s75 = sphi 0, %s73
      %s76 = sphi 0, %s75
      %s90 = sphi 0, %s76
      %s94 = sphi 0, %s94
      %s96 = sphi 0, %s94
      %s97 = sphi 0, %s96
      %s111 = sphi 0, %s97
      %s115 = sphi 0, %s115
      %s117 = sphi 0, %s115
      %s118 = sphi 0, %s117
      %s132 = sphi 0, %s118
      %s138 = sphi 0, %s140
      %s141 = sphi 0, %s138
      %s142 = sphi 0, %s141
      %s158 = sphi 0, %s142
    $region4: #{tpu_custom_call.1} parent=1 // loop_header_branch
      %21 = sbr.rel (%p19) target = $region8
    $region5: #{tpu_custom_call.1} parent=1 // loop_body
      %s23 = ssub.s32 %s18, 1
      %s24 = ssub.s32 %s18, 2
      %s25 = sadd.s32 %s18, 1
      %s26 = ssub.s32 %s18, %s25
      %p27 = scmp.eq.s32.totalorder %s26, 0
      %s29 = sadd.s32 %s28, 1
      %s30 = scalar_select %p27, %s28, %s29
      %p33 = pneg %p27
      %p34 = scmp.eq.s32.totalorder %s18, 1
      %p35 = por %p33, %p34
      %p36 = scmp.ne.s32.totalorder %s28, %s31
      %p37 = scmp.eq.s32.totalorder %s18, 0
      %p38 = por %p36, %p37
      %p39 = scmp.ne.s32.totalorder %s28, %s31
      %p40 = scmp.eq.s32.totalorder %s23, 1
      %p41 = por %p39, %p40
      %p42 = scmp.ne.s32.totalorder %s31, %s32
      %p43 = scmp.eq.s32.totalorder %s23, 0
      %p44 = por %p42, %p43
      %p45 = scmp.ne.s32.totalorder %s31, %s32
      %p46 = scmp.eq.s32.totalorder %s24, 1
      %p47 = por %p45, %p46
      %p49 = scmp.ne.s32.totalorder %s32, %s48
      %p50 = scmp.eq.s32.totalorder %s24, 0
      %p51 = por %p49, %p50
      %s53 = sadd.s32 %s52, 1
      %p56 = scmp.eq.s32.totalorder %s18, 1
      %p57 = scmp.ne.s32.totalorder %s52, %s54
      %p58 = scmp.eq.s32.totalorder %s18, 0
      %p59 = por %p57, %p58
      %p60 = scmp.ne.s32.totalorder %s52, %s54
      %p61 = scmp.eq.s32.totalorder %s23, 1
      %p62 = por %p60, %p61
      %p63 = scmp.ne.s32.totalorder %s54, %s55
      %p64 = scmp.eq.s32.totalorder %s23, 0
      %p65 = por %p63, %p64
      %p66 = scmp.ne.s32.totalorder %s54, %s55
      %p67 = scmp.eq.s32.totalorder %s24, 1
      %p68 = por %p66, %p67
      %p70 = scmp.ne.s32.totalorder %s55, %s69
      %p71 = scmp.eq.s32.totalorder %s24, 0
      %p72 = por %p70, %p71
      %s74 = sadd.s32 %s73, 1
      %p77 = scmp.eq.s32.totalorder %s18, 1
      %p78 = scmp.ne.s32.totalorder %s73, %s75
      %p79 = scmp.eq.s32.totalorder %s18, 0
      %p80 = por %p78, %p79
      %p81 = scmp.ne.s32.totalorder %s73, %s75
      %p82 = scmp.eq.s32.totalorder %s23, 1
      %p83 = por %p81, %p82
      %p84 = scmp.ne.s32.totalorder %s75, %s76
      %p85 = scmp.eq.s32.totalorder %s23, 0
      %p86 = por %p84, %p85
      %p87 = scmp.ne.s32.totalorder %s75, %s76
      %p88 = scmp.eq.s32.totalorder %s24, 1
      %p89 = por %p87, %p88
      %p91 = scmp.ne.s32.totalorder %s76, %s90
      %p92 = scmp.eq.s32.totalorder %s24, 0
      %p93 = por %p91, %p92
      %s95 = sadd.s32 %s94, 1
      %p98 = scmp.eq.s32.totalorder %s18, 1
      %p99 = scmp.ne.s32.totalorder %s94, %s96
      %p100 = scmp.eq.s32.totalorder %s18, 0
      %p101 = por %p99, %p100
      %p102 = scmp.ne.s32.totalorder %s94, %s96
      %p103 = scmp.eq.s32.totalorder %s23, 1
      %p104 = por %p102, %p103
      %p105 = scmp.ne.s32.totalorder %s96, %s97
      %p106 = scmp.eq.s32.totalorder %s23, 0
      %p107 = por %p105, %p106
      %p108 = scmp.ne.s32.totalorder %s96, %s97
      %p109 = scmp.eq.s32.totalorder %s24, 1
      %p110 = por %p108, %p109
      %p112 = scmp.ne.s32.totalorder %s97, %s111
      %p113 = scmp.eq.s32.totalorder %s24, 0
      %p114 = por %p112, %p113
      %s116 = sadd.s32 %s115, 1
      %p119 = scmp.eq.s32.totalorder %s18, 1
      %p120 = scmp.ne.s32.totalorder %s115, %s117
      %p121 = scmp.eq.s32.totalorder %s18, 0
      %p122 = por %p120, %p121
      %p123 = scmp.ne.s32.totalorder %s115, %s117
      %p124 = scmp.eq.s32.totalorder %s23, 1
      %p125 = por %p123, %p124
      %p126 = scmp.ne.s32.totalorder %s117, %s118
      %p127 = scmp.eq.s32.totalorder %s23, 0
      %p128 = por %p126, %p127
      %p129 = scmp.ne.s32.totalorder %s117, %s118
      %p130 = scmp.eq.s32.totalorder %s24, 1
      %p131 = por %p129, %p130
      %p133 = scmp.ne.s32.totalorder %s118, %s132
      %p134 = scmp.eq.s32.totalorder %s24, 0
      %p135 = por %p133, %p134
      %s136 = ssub.s32 %s18, %s25
      %p137 = scmp.eq.s32.totalorder %s136, 0
      %s139 = sadd.s32 %s138, 1
      %s140 = scalar_select %p137, %s138, %s139
      %p143 = pneg %p137
      %p144 = scmp.eq.s32.totalorder %s18, 1
      %p145 = por %p143, %p144
      %p146 = scmp.ne.s32.totalorder %s138, %s141
      %p147 = scmp.eq.s32.totalorder %s18, 0
      %p148 = por %p146, %p147
      %p149 = scmp.ne.s32.totalorder %s138, %s141
      %p150 = scmp.eq.s32.totalorder %s23, 1
      %p151 = por %p149, %p150
      %p152 = scmp.ne.s32.totalorder %s141, %s142
      %p153 = scmp.eq.s32.totalorder %s23, 0
      %p154 = por %p152, %p153
      %p155 = scmp.ne.s32.totalorder %s141, %s142
      %p156 = scmp.eq.s32.totalorder %s24, 1
      %p157 = por %p155, %p156
      %p159 = scmp.ne.s32.totalorder %s142, %s158
      %p160 = scmp.eq.s32.totalorder %s24, 0
      %p161 = por %p159, %p160
      %p162 = scmp.le.s32.totalorder 1, %s18
      %p163 = scmp.lt.s32.totalorder %s18, 3
      %p164 = pnand %p162, %p163
      %p165 = pneg %p164
      // Predicated region
      $region9: #{tpu_custom_call.1} parent=5 // pred_check
        _
      $region10: #{tpu_custom_call.1} parent=5 // pred_check_branch
        %167 = sbr.rel (%p164) target = $region12
      $region11: #{tpu_custom_call.1} parent=5 // pred_region
        %s168 = ssub.s32 %s18, 1
        // Predicated region
        $region13: #{tpu_custom_call.1} parent=11 // pred_check
          %p169 = pneg %p65
        $region14: #{tpu_custom_call.1} parent=11 // pred_check_branch
          %171 = sbr.rel (%p169) target = $region16
        $region15: #{tpu_custom_call.1} parent=11 // pred_region
          %s173 = ssub.s32 3072, 3072
          %174 = vsyncadd [#allocation7], %s173
          %s175 = sshll.u32 [#allocation6], 4
          %s176 = int_to_ptr.vmem [resolvable:$true] %s175
          %181 = dma.hbm_to_vmem [thread:$0]  %s1, 3072, %s176, [#allocation7], 64, 64, 4
        $region16: #{tpu_custom_call.1} parent=11 // pred_fallthru
          _
        // Predicated region
        $region17: #{tpu_custom_call.1} parent=11 // pred_check
          %p182 = pneg %p86
        $region18: #{tpu_custom_call.1} parent=11 // pred_check_branch
          %184 = sbr.rel (%p182) target = $region20
        $region19: #{tpu_custom_call.1} parent=11 // pred_region
          _
        $region20: #{tpu_custom_call.1} parent=11 // pred_fallthru
          _
        // Predicated region
        $region21: #{tpu_custom_call.1} parent=11 // pred_check
          %p185 = pneg %p107
        $region22: #{tpu_custom_call.1} parent=11 // pred_check_branch
          %187 = sbr.rel (%p185) target = $region24
        $region23: #{tpu_custom_call.1} parent=11 // pred_region
          %s189 = ssub.s32 12288, 12288
          %190 = vsyncadd [#allocation7], %s189
          %s191 = sshll.u32 [#allocation8], 4
          %s192 = int_to_ptr.vmem [resolvable:$true] %s191
          %197 = dma.hbm_to_vmem [thread:$0]  %s3, 12288, %s192, [#allocation7], 64, 64, 4
        $region24: #{tpu_custom_call.1} parent=11 // pred_fallthru
          _
        // Predicated region
        $region25: #{tpu_custom_call.1} parent=11 // pred_check
          %p198 = pneg %p128
        $region26: #{tpu_custom_call.1} parent=11 // pred_check_branch
          %200 = sbr.rel (%p198) target = $region28
        $region27: #{tpu_custom_call.1} parent=11 // pred_region
          _
        $region28: #{tpu_custom_call.1} parent=11 // pred_fallthru
          _
      $region12: #{tpu_custom_call.1} parent=5 // pred_fallthru
        _
      %p201 = scmp.lt.s32.totalorder %s18, 2
      // Predicated region
      $region29: #{tpu_custom_call.1} parent=5 // pred_check
        %p202 = pneg %p201
      $region30: #{tpu_custom_call.1} parent=5 // pred_check_branch
        %204 = sbr.rel (%p202) target = $region32
      $region31: #{tpu_custom_call.1} parent=5 // pred_region
        // Predicated region
        $region33: #{tpu_custom_call.1} parent=31 // pred_check
          %p205 = pneg %p38
        $region34: #{tpu_custom_call.1} parent=31 // pred_check_branch
          %207 = sbr.rel (%p205) target = $region36
        $region35: #{tpu_custom_call.1} parent=31 // pred_region
          %s208 = sand.u32 %s28, 1
          %s209 = scalar_lea.sflag [#allocation4], %s208
          %s210 = sand.u32 %s28, 1
          %s211 = smul.addr %s210, 16
          %s212 = scalar_lea.vmem [#allocation3], %s211
          %s213 = smul.u32 4, %s18
          %s215 = ssub.s32 256, 256
          %216 = vsyncadd %s209, %s215
          %s217 = smul.addr %s213, 64
          %s218 = scalar_lea.hbm %s0, %s217
          %s219 = sshll.u32 %s212, 4
          %s220 = int_to_ptr.vmem [resolvable:$true] %s219
          %225 = dma.hbm_to_vmem [thread:$0]  %s218, 256, %s220, %s209, 64, 64, 4
        $region36: #{tpu_custom_call.1} parent=31 // pred_fallthru
          _
      $region32: #{tpu_custom_call.1} parent=5 // pred_fallthru
        _
      %p226 = scmp.le.s32.totalorder 1, %s18
      %p227 = scmp.lt.s32.totalorder %s18, 3
      %p228 = pnand %p226, %p227
      %p229 = pneg %p228
      // Predicated region
      $region37: #{tpu_custom_call.1} parent=5 // pred_check
        _
      $region38: #{tpu_custom_call.1} parent=5 // pred_check_branch
        %231 = sbr.rel (%p228) target = $region40
      $region39: #{tpu_custom_call.1} parent=5 // pred_region
        %s232 = ssub.s32 %s18, 1
        %s233 = sand.u32 %s31, 1
        %s234 = scalar_lea.sflag [#allocation4], %s233
        %s235 = sand.u32 %s31, 1
        %s236 = smul.addr %s235, 16
        %s237 = scalar_lea.vmem [#allocation3], %s236
        // Predicated region
        $region41: #{tpu_custom_call.1} parent=39 // pred_check
          %p238 = pneg %p44
        $region42: #{tpu_custom_call.1} parent=39 // pred_check_branch
          %240 = sbr.rel (%p238) target = $region44
        $region43: #{tpu_custom_call.1} parent=39 // pred_region
          %241 = dma.done %s234, 256
        $region44: #{tpu_custom_call.1} parent=39 // pred_fallthru
          _
        // Predicated region
        $region45: #{tpu_custom_call.1} parent=39 // pred_check
          %p242 = pneg %p65
        $region46: #{tpu_custom_call.1} parent=39 // pred_check_branch
          %244 = sbr.rel (%p242) target = $region48
        $region47: #{tpu_custom_call.1} parent=39 // pred_region
          %245 = dma.done [#allocation7], 3072
        $region48: #{tpu_custom_call.1} parent=39 // pred_fallthru
          _
        // Predicated region
        $region49: #{tpu_custom_call.1} parent=39 // pred_check
          %p246 = pneg %p107
        $region50: #{tpu_custom_call.1} parent=39 // pred_check_branch
          %248 = sbr.rel (%p246) target = $region52
        $region51: #{tpu_custom_call.1} parent=39 // pred_region
          %249 = dma.done [#allocation7], 12288
        $region52: #{tpu_custom_call.1} parent=39 // pred_fallthru
          _
        %s250 = sand.u32 %s31, 1
        %s251 = scalar_lea.sflag [#allocation4], %s250
        %s252 = sand.u32 %s31, 1
        %s253 = smul.addr %s252, 16
        %s254 = scalar_lea.vmem [#allocation3], %s253
        %p255 = pneg %p44
        %p256 = pneg %p41
        %p257 = pneg %p65
        %p258 = pneg %p62
        %p259 = pneg %p86
        %p260 = pneg %p83
        %p261 = pneg %p107
        %p262 = pneg %p104
        %p263 = pneg %p128
        %p264 = pneg %p125
        %p265 = pneg %p154
        %p266 = pneg %p151
        %s267 = sand.u32 %s141, 1
        %s268 = scalar_lea.sflag [#allocation5], %s267
        %s269 = sand.u32 %s141, 1
        %s270 = smul.addr %s269, 32
        %s271 = scalar_lea.vmem [#allocation9], %s270
        %s272 = smul.u32 4, %s23
        %s273 = smul.u32 4, %s23
        %v275 = vlaneseq
        %v276 = vshrl.u32 %v275, 7
        %v277 = vadd.s32 %v276, 8
        %v278 = vadd.s32 %v276, 16
        %v279 = vadd.s32 %v276, 24
        %vm280 = vcmp.lt.s32.totalorder %v276, 0
        %v281 = vsub.s32 0, %v276
        %v282 = vsel %vm280, %v281, %v276
        %v283 = vshrl.u32 %v282, 4
        %v284 = vand.u32 %v282, 15
        %v285 = vsub.s32 0, %v284
        %v286 = vsel %vm280, %v285, %v284
        %vm287 = vcmp.lt.s32.totalorder %v277, 0
        %v288 = vsub.s32 0, %v277
        %v289 = vsel %vm287, %v288, %v277
        %v290 = vshrl.u32 %v289, 4
        %v291 = vand.u32 %v289, 15
        %v292 = vsub.s32 0, %v291
        %v293 = vsel %vm287, %v292, %v291
        %vm294 = vcmp.lt.s32.totalorder %v278, 0
        %v295 = vsub.s32 0, %v278
        %v296 = vsel %vm294, %v295, %v278
        %v297 = vshrl.u32 %v296, 4
        %v298 = vand.u32 %v296, 15
        %v299 = vsub.s32 0, %v298
        %v300 = vsel %vm294, %v299, %v298
        %vm301 = vcmp.lt.s32.totalorder %v279, 0
        %v302 = vsub.s32 0, %v279
        %v303 = vsel %vm301, %v302, %v279
        %v304 = vshrl.u32 %v303, 4
        %v305 = vand.u32 %v303, 15
        %v306 = vsub.s32 0, %v305
        %v307 = vsel %vm301, %v306, %v305
        %vm308 = vcmp.ne.s32.totalorder %v286, 0
        %vm309 = vcmp.ne.s32.totalorder %v293, 0
        %vm310 = vcmp.ne.s32.totalorder %v300, 0
        %vm311 = vcmp.ne.s32.totalorder %v307, 0
        %vm312 = vcmp.lt.s32.totalorder %v286, 0
        %vm313 = vcmp.lt.s32.totalorder %v293, 0
        %vm314 = vcmp.lt.s32.totalorder %v300, 0
        %vm315 = vcmp.lt.s32.totalorder %v307, 0
        %vm316 = vmand %vm312, %vm308
        %vm317 = vmand %vm313, %vm309
        %vm318 = vmand %vm314, %vm310
        %vm319 = vmand %vm315, %vm311
        %v320 = vadd.s32 %v286, 16
        %v321 = vadd.s32 %v293, 16
        %v322 = vadd.s32 %v300, 16
        %v323 = vadd.s32 %v307, 16
        %v324 = vsel %vm316, %v320, %v286
        %v325 = vsel %vm317, %v321, %v293
        %v326 = vsel %vm318, %v322, %v300
        %v327 = vsel %vm319, %v323, %v307
        %vm328 = vcmp.ne.s32.totalorder %v324, 0
        %vm329 = vcmp.ne.s32.totalorder %v325, 0
        %vm330 = vcmp.ne.s32.totalorder %v326, 0
        %vm331 = vcmp.ne.s32.totalorder %v327, 0
        %v332 = vsel %vm328, 1, 0
        %v333 = vsel %vm329, 1, 0
        %v334 = vsel %vm330, 1, 0
        %v335 = vsel %vm331, 1, 0
        %v336 = vcvt.s32.f32 %v332
        %v337 = vcvt.s32.f32 %v333
        %v338 = vcvt.s32.f32 %v334
        %v339 = vcvt.s32.f32 %v335
        %vm340 = vcmp.ne.s32.totalorder %v324, 15
        %vm341 = vcmp.ne.s32.totalorder %v325, 15
        %vm342 = vcmp.ne.s32.totalorder %v326, 15
        %vm343 = vcmp.ne.s32.totalorder %v327, 15
        %v344 = vsel %vm340, 1, 0
        %v345 = vsel %vm341, 1, 0
        %v346 = vsel %vm342, 1, 0
        %v347 = vsel %vm343, 1, 0
        %v348 = vcvt.s32.f32 %v344
        %v349 = vcvt.s32.f32 %v345
        %v350 = vcvt.s32.f32 %v346
        %v351 = vcvt.s32.f32 %v347
        %v352 = vld [vmem:[%s237] sm:$0xf]
        %v353 = vld [vmem:[%s237 + $0x4] sm:$0xf]
        %v354 = vld [vmem:[%s237 + $0x8] sm:$0xf]
        %v355 = vld [vmem:[%s237 + $0xc] sm:$0xf]
        %v356 = vunpack.c.l.bf16 %v352
        %v357 = vunpack.c.l.bf16 %v353
        %v358 = vunpack.c.l.bf16 %v354
        %v359 = vunpack.c.l.bf16 %v355
        %v360 = vld [vmem:[#allocation6] sm:$0xf]
        %v361 = vld [vmem:[#allocation6 + $0x4] sm:$0xf]
        %v362 = vld [vmem:[#allocation6 + $0x8] sm:$0xf]
        %v363 = vld [vmem:[#allocation6 + $0xc] sm:$0xf]
        %v364 = vld [vmem:[#allocation6 + $0x10] sm:$0xf]
        %v365 = vld [vmem:[#allocation6 + $0x14] sm:$0xf]
        %v366 = vld [vmem:[#allocation6 + $0x18] sm:$0xf]
        %v367 = vld [vmem:[#allocation6 + $0x1c] sm:$0xf]
        %v368 = vld [vmem:[#allocation6 + $0x20] sm:$0xf]
        %v369 = vld [vmem:[#allocation6 + $0x24] sm:$0xf]
        %v370 = vld [vmem:[#allocation6 + $0x28] sm:$0xf]
        %v371 = vld [vmem:[#allocation6 + $0x2c] sm:$0xf]
        %v372 = vld [vmem:[#allocation6 + $0x30] sm:$0xf]
        %v373 = vld [vmem:[#allocation6 + $0x34] sm:$0xf]
        %v374 = vld [vmem:[#allocation6 + $0x38] sm:$0xf]
        %v375 = vld [vmem:[#allocation6 + $0x3c] sm:$0xf]
        %v376 = vld [vmem:[#allocation6 + $0x40] sm:$0xf]
        %v377 = vld [vmem:[#allocation6 + $0x44] sm:$0xf]
        %v378 = vld [vmem:[#allocation6 + $0x48] sm:$0xf]
        %v379 = vld [vmem:[#allocation6 + $0x4c] sm:$0xf]
        %v380 = vld [vmem:[#allocation6 + $0x50] sm:$0xf]
        %v381 = vld [vmem:[#allocation6 + $0x54] sm:$0xf]
        %v382 = vld [vmem:[#allocation6 + $0x58] sm:$0xf]
        %v383 = vld [vmem:[#allocation6 + $0x5c] sm:$0xf]
        %v384 = vld [vmem:[#allocation6 + $0x60] sm:$0xf]
        %v385 = vld [vmem:[#allocation6 + $0x64] sm:$0xf]
        %v386 = vld [vmem:[#allocation6 + $0x68] sm:$0xf]
        %v387 = vld [vmem:[#allocation6 + $0x6c] sm:$0xf]
        %v388 = vld [vmem:[#allocation6 + $0x70] sm:$0xf]
        %v389 = vld [vmem:[#allocation6 + $0x74] sm:$0xf]
        %v390 = vld [vmem:[#allocation6 + $0x78] sm:$0xf]
        %v391 = vld [vmem:[#allocation6 + $0x7c] sm:$0xf]
        %v392 = vld [vmem:[#allocation6 + $0x80] sm:$0xf]
        %v393 = vld [vmem:[#allocation6 + $0x84] sm:$0xf]
        %v394 = vld [vmem:[#allocation6 + $0x88] sm:$0xf]
        %v395 = vld [vmem:[#allocation6 + $0x8c] sm:$0xf]
        %v396 = vld [vmem:[#allocation6 + $0x90] sm:$0xf]
        %v397 = vld [vmem:[#allocation6 + $0x94] sm:$0xf]
        %v398 = vld [vmem:[#allocation6 + $0x98] sm:$0xf]
        %v399 = vld [vmem:[#allocation6 + $0x9c] sm:$0xf]
        %v400 = vld [vmem:[#allocation6 + $0xa0] sm:$0xf]
        %v401 = vld [vmem:[#allocation6 + $0xa4] sm:$0xf]
        %v402 = vld [vmem:[#allocation6 + $0xa8] sm:$0xf]
        %v403 = vld [vmem:[#allocation6 + $0xac] sm:$0xf]
        %v404 = vld [vmem:[#allocation6 + $0xb0] sm:$0xf]
        %v405 = vld [vmem:[#allocation6 + $0xb4] sm:$0xf]
        %v406 = vld [vmem:[#allocation6 + $0xb8] sm:$0xf]
        %v407 = vld [vmem:[#allocation6 + $0xbc] sm:$0xf]
        %v408 = vrot.slane %v356, 7
        %v409 = vrot.slane %v357, 7
        %v410 = vrot.slane %v358, 7
        %v411 = vrot.slane %v359, 7
        %vm412 = vcmp.lt.s32.totalorder %v276, 1
        %v413 = vsel %vm412, %v410, %v411
        %v414 = vsel %vm412, %v409, %v410
        %v415 = vsel %vm412, %v408, %v409
        %v416 = vsel %vm412, %v411, %v408
        %v417 = vmul.f32 %v416, %v336
        %v418 = vmul.f32 %v415, %v337
        %v419 = vmul.f32 %v414, %v338
        %v420 = vmul.f32 %v413, %v339
        %v421 = vrot.slane %v356, 1
        %v422 = vrot.slane %v357, 1
        %v423 = vrot.slane %v358, 1
        %v424 = vrot.slane %v359, 1
        %vm425 = vcmp.lt.s32.totalorder %v276, 7
        %v426 = vsel %vm425, %v423, %v424
        %v427 = vsel %vm425, %v422, %v423
        %v428 = vsel %vm425, %v421, %v422
        %v429 = vsel %vm425, %v424, %v421
        %v430 = vmul.f32 %v428, %v348
        %v431 = vmul.f32 %v427, %v349
        %v432 = vmul.f32 %v426, %v350
        %v433 = vmul.f32 %v429, %v351
        %v434 = vpack.c.bf16 %v418, %v417
        %v435 = vpack.c.bf16 %v420, %v419
        %436 = vst [vmem:[#allocation2] sm:$0xff] %v434
        %437 = vst [vmem:[#allocation2 + $0x18] sm:$0xff] %v435
        %v442 = vunpack.c.l.b16 %v352
        %v443 = vunpack.c.l.b16 %v353
        %v444 = vunpack.c.l.b16 %v354
        %v445 = vunpack.c.l.b16 %v355
        %v446 = vpack.c.b16 %v443, %v442
        %v447 = vpack.c.b16 %v445, %v444
        %450 = vst [vmem:[#allocation2 + $0x8] sm:$0xff] %v446
        %451 = vst [vmem:[#allocation2 + $0x20] sm:$0xff] %v447
        %v452 = vpack.c.bf16 %v431, %v430
        %v453 = vpack.c.bf16 %v433, %v432
        %454 = vst [vmem:[#allocation2 + $0x10] sm:$0xff] %v452
        %455 = vst [vmem:[#allocation2 + $0x28] sm:$0xff] %v453
        %v456 = vld [vmem:[#allocation2] sm:$0xff]
        %v457 = vld [vmem:[#allocation2 + $0x8] sm:$0xff]
        %v458 = vld [vmem:[#allocation2 + $0x10] sm:$0xff]
        %v459 = vld [vmem:[#allocation2 + $0x18] sm:$0xff]
        %v460 = vld [vmem:[#allocation2 + $0x20] sm:$0xff]
        %v461 = vld [vmem:[#allocation2 + $0x28] sm:$0xff]
        %v462 = vld [vmem:[%s2] sm:$0x1]
        %v464 = vlaneseq
        %v465 = vshrl.u32 %v464, 7
        %v466 = vsub.s32 0, %v465
        %v467 = vrot.slane %v462, %v466
        %v517 = vunpack.c.l.b16 %v360
        %v518 = vunpack.c.l.b16 %v361
        %v519 = vunpack.c.l.b16 %v362
        %v520 = vunpack.c.l.b16 %v363
        %v521 = vunpack.c.l.b16 %v364
        %v522 = vunpack.c.l.b16 %v365
        %v523 = vunpack.c.l.b16 %v366
        %v524 = vunpack.c.l.b16 %v367
        %v525 = vunpack.c.l.b16 %v368
        %v526 = vunpack.c.l.b16 %v369
        %v527 = vunpack.c.l.b16 %v370
        %v528 = vunpack.c.l.b16 %v371
        %v529 = vunpack.c.l.b16 %v372
        %v530 = vunpack.c.l.b16 %v373
        %v531 = vunpack.c.l.b16 %v374
        %v532 = vunpack.c.l.b16 %v375
        %v533 = vunpack.c.l.b16 %v376
        %v534 = vunpack.c.l.b16 %v377
        %v535 = vunpack.c.l.b16 %v378
        %v536 = vunpack.c.l.b16 %v379
        %v537 = vunpack.c.l.b16 %v380
        %v538 = vunpack.c.l.b16 %v381
        %v539 = vunpack.c.l.b16 %v382
        %v540 = vunpack.c.l.b16 %v383
        %v541 = vunpack.c.l.b16 %v384
        %v542 = vunpack.c.l.b16 %v385
        %v543 = vunpack.c.l.b16 %v386
        %v544 = vunpack.c.l.b16 %v387
        %v545 = vunpack.c.l.b16 %v388
        %v546 = vunpack.c.l.b16 %v389
        %v547 = vunpack.c.l.b16 %v390
        %v548 = vunpack.c.l.b16 %v391
        %v549 = vunpack.c.l.b16 %v392
        %v550 = vunpack.c.l.b16 %v393
        %v551 = vunpack.c.l.b16 %v394
        %v552 = vunpack.c.l.b16 %v395
        %v553 = vunpack.c.l.b16 %v396
        %v554 = vunpack.c.l.b16 %v397
        %v555 = vunpack.c.l.b16 %v398
        %v556 = vunpack.c.l.b16 %v399
        %v557 = vunpack.c.l.b16 %v400
        %v558 = vunpack.c.l.b16 %v401
        %v559 = vunpack.c.l.b16 %v402
        %v560 = vunpack.c.l.b16 %v403
        %v561 = vunpack.c.l.b16 %v404
        %v562 = vunpack.c.l.b16 %v405
        %v563 = vunpack.c.l.b16 %v406
        %v564 = vunpack.c.l.b16 %v407
        %v565 = vpack.c.b16 %v518, %v517
        %v566 = vpack.c.b16 %v520, %v519
        %v567 = vpack.c.b16 %v522, %v521
        %v568 = vpack.c.b16 %v524, %v523
        %v569 = vpack.c.b16 %v526, %v525
        %v570 = vpack.c.b16 %v528, %v527
        %v571 = vpack.c.b16 %v530, %v529
        %v572 = vpack.c.b16 %v532, %v531
        %v573 = vpack.c.b16 %v534, %v533
        %v574 = vpack.c.b16 %v536, %v535
        %v575 = vpack.c.b16 %v538, %v537
        %v576 = vpack.c.b16 %v540, %v539
        %v577 = vpack.c.b16 %v542, %v541
        %v578 = vpack.c.b16 %v544, %v543
        %v579 = vpack.c.b16 %v546, %v545
        %v580 = vpack.c.b16 %v548, %v547
        %v581 = vpack.c.b16 %v550, %v549
        %v582 = vpack.c.b16 %v552, %v551
        %v583 = vpack.c.b16 %v554, %v553
        %v584 = vpack.c.b16 %v556, %v555
        %v585 = vpack.c.b16 %v558, %v557
        %v586 = vpack.c.b16 %v560, %v559
        %v587 = vpack.c.b16 %v562, %v561
        %v588 = vpack.c.b16 %v564, %v563
        %613 = vmatprep.subr.bf16.mxu0 0
        %614 = vmatpush1.bf16.msra.mxu0 %v565
        %615 = vmatprep.subr.bf16.mxu0 0
        %616 = vmatpush1.bf16.msra.mxu0 %v566
        %617 = vmatprep.subr.bf16.mxu0 0
        %618 = vmatpush1.bf16.msra.mxu0 %v567
        %619 = vmatprep.subr.bf16.mxu0 0
        %620 = vmatpush1.bf16.msra.mxu0 %v568
        %621 = vmatprep.subr.bf16.mxu0 0
        %622 = vmatpush1.bf16.msra.mxu0 %v569
        %623 = vmatprep.subr.bf16.mxu0 0
        %624 = vmatpush1.bf16.msra.mxu0 %v570
        %625 = vmatprep.subr.bf16.mxu0 0
        %626 = vmatpush1.bf16.msra.mxu0 %v571
        %627 = vmatprep.subr.bf16.mxu0 0
        %628 = vmatpush1.bf16.msra.mxu0 %v572
        %629 = vmatprep.subr.bf16.mxu0 0
        %630 = vmatpush1.bf16.msra.mxu0 %v573
        %631 = vmatprep.subr.bf16.mxu0 0
        %632 = vmatpush1.bf16.msra.mxu0 %v574
        %633 = vmatprep.subr.bf16.mxu0 0
        %634 = vmatpush1.bf16.msra.mxu0 %v575
        %635 = vmatprep.subr.bf16.mxu0 0
        %636 = vmatpush1.bf16.msra.mxu0 %v576
        %637 = vmatprep.subr.bf16.mxu0 0
        %638 = vmatpush1.bf16.msra.mxu0 %v577
        %639 = vmatprep.subr.bf16.mxu0 0
        %640 = vmatpush1.bf16.msra.mxu0 %v578
        %641 = vmatprep.subr.bf16.mxu0 0
        %642 = vmatpush1.bf16.msra.mxu0 %v579
        %643 = vmatprep.subr.bf16.mxu0 0
        %644 = vmatpush1.bf16.msra.mxu0 %v580
        %645 = vmatprep.mubr.bf16.mxu0 %v457
        %646 = vmatmul.mubr.bf16.gmra.mrb[0].mxu0 %v456
        %v647 = vpop.f32.mrb[0].mxu0
        %v648 = vadd.f32 %v467, %v647
        %v649 = vpop.f32.mrb[0].mxu0
        %v650 = vpop.f32.mrb[0].mxu0
        %v651 = vadd.f32 %v467, %v650
        %v652 = vpop.f32.mrb[0].mxu0
        %653 = vmatprep.mubr.bf16.mxu0 %v460
        %654 = vmatmul.mubr.bf16.gmra.mrb[0].mxu0 %v459
        %v655 = vpop.f32.mrb[0].mxu0
        %v656 = vadd.f32 %v467, %v655
        %v657 = vpop.f32.mrb[0].mxu0
        %v658 = vpop.f32.mrb[0].mxu0
        %v659 = vadd.f32 %v467, %v658
        %v660 = vpop.f32.mrb[0].mxu0
        %661 = vdwg.mxu0
        %662 = vmatprep.subr.bf16.mxu0 0
        %663 = vmatpush1.bf16.msra.mxu0 %v581
        %664 = vmatprep.subr.bf16.mxu0 0
        %665 = vmatpush1.bf16.msra.mxu0 %v582
        %666 = vmatprep.subr.bf16.mxu0 0
        %667 = vmatpush1.bf16.msra.mxu0 %v583
        %668 = vmatprep.subr.bf16.mxu0 0
        %669 = vmatpush1.bf16.msra.mxu0 %v584
        %670 = vmatprep.subr.bf16.mxu0 0
        %671 = vmatpush1.bf16.msra.mxu0 %v585
        %672 = vmatprep.subr.bf16.mxu0 0
        %673 = vmatpush1.bf16.msra.mxu0 %v586
        %674 = vmatprep.subr.bf16.mxu0 0
        %675 = vmatpush1.bf16.msra.mxu0 %v587
        %676 = vmatprep.subr.bf16.mxu0 0
        %677 = vmatpush1.bf16.msra.mxu0 %v588
        %678 = vmatprep.subr.bf16.mxu0 0
        %679 = vmatpush1.bf16.msra.mxu0 0
        %680 = vmatprep.subr.bf16.mxu0 0
        %681 = vmatpush1.bf16.msra.mxu0 0
        %682 = vmatprep.subr.bf16.mxu0 0
        %683 = vmatpush1.bf16.msra.mxu0 0
        %684 = vmatprep.subr.bf16.mxu0 0
        %685 = vmatpush1.bf16.msra.mxu0 0
        %686 = vmatprep.subr.bf16.mxu0 0
        %687 = vmatpush1.bf16.msra.mxu0 0
        %688 = vmatprep.subr.bf16.mxu0 0
        %689 = vmatpush1.bf16.msra.mxu0 0
        %690 = vmatprep.subr.bf16.mxu0 0
        %691 = vmatpush1.bf16.msra.mxu0 0
        %692 = vmatprep.subr.bf16.mxu0 0
        %693 = vmatpush1.bf16.msra.mxu0 0
        %694 = vmatprep.mubr.bf16.mxu0 0
        %695 = vmatmul.mubr.bf16.gmra.mrb[0].mxu0 %v458
        %v696 = vpop.f32.mrb[0].mxu0
        %v697 = vadd.f32 %v648, %v696
        %v698 = vpop.f32.mrb[0].mxu0
        %v699 = vpop.f32.mrb[0].mxu0
        %v700 = vadd.f32 %v651, %v699
        %v701 = vpop.f32.mrb[0].mxu0
        %702 = vmatprep.mubr.bf16.mxu0 0
        %703 = vmatmul.mubr.bf16.gmra.mrb[0].mxu0 %v461
        %v704 = vpop.f32.mrb[0].mxu0
        %v705 = vadd.f32 %v656, %v704
        %v706 = vpop.f32.mrb[0].mxu0
        %v707 = vpop.f32.mrb[0].mxu0
        %v708 = vadd.f32 %v659, %v707
        %v709 = vpop.f32.mrb[0].mxu0
        %710 = vdwg.mxu0
        %v711 = vmax.f32 %v697, 0.0
        %v712 = vmax.f32 %v700, 0.0
        %v713 = vmax.f32 %v705, 0.0
        %v714 = vmax.f32 %v708, 0.0
        %v715 = vld [vmem:[#allocation8] sm:$0xf]
        %v716 = vld [vmem:[#allocation8 + $0x4] sm:$0xf]
        %v717 = vld [vmem:[#allocation8 + $0x8] sm:$0xf]
        %v718 = vld [vmem:[#allocation8 + $0xc] sm:$0xf]
        %v719 = vld [vmem:[#allocation8 + $0x10] sm:$0xf]
        %v720 = vld [vmem:[#allocation8 + $0x14] sm:$0xf]
        %v721 = vld [vmem:[#allocation8 + $0x18] sm:$0xf]
        %v722 = vld [vmem:[#allocation8 + $0x1c] sm:$0xf]
        %v723 = vld [vmem:[#allocation8 + $0x20] sm:$0xf]
        %v724 = vld [vmem:[#allocation8 + $0x24] sm:$0xf]
        %v725 = vld [vmem:[#allocation8 + $0x28] sm:$0xf]
        %v726 = vld [vmem:[#allocation8 + $0x2c] sm:$0xf]
        %v727 = vld [vmem:[#allocation8 + $0x30] sm:$0xf]
        %v728 = vld [vmem:[#allocation8 + $0x34] sm:$0xf]
        %v729 = vld [vmem:[#allocation8 + $0x38] sm:$0xf]
        %v730 = vld [vmem:[#allocation8 + $0x3c] sm:$0xf]
        %v731 = vld [vmem:[#allocation8 + $0x40] sm:$0xf]
        %v732 = vld [vmem:[#allocation8 + $0x44] sm:$0xf]
        %v733 = vld [vmem:[#allocation8 + $0x48] sm:$0xf]
        %v734 = vld [vmem:[#allocation8 + $0x4c] sm:$0xf]
        %v735 = vld [vmem:[#allocation8 + $0x50] sm:$0xf]
        %v736 = vld [vmem:[#allocation8 + $0x54] sm:$0xf]
        %v737 = vld [vmem:[#allocation8 + $0x58] sm:$0xf]
        %v738 = vld [vmem:[#allocation8 + $0x5c] sm:$0xf]
        %v739 = vld [vmem:[#allocation8 + $0x60] sm:$0xf]
        %v740 = vld [vmem:[#allocation8 + $0x64] sm:$0xf]
        %v741 = vld [vmem:[#allocation8 + $0x68] sm:$0xf]
        %v742 = vld [vmem:[#allocation8 + $0x6c] sm:$0xf]
        %v743 = vld [vmem:[#allocation8 + $0x70] sm:$0xf]
        %v744 = vld [vmem:[#allocation8 + $0x74] sm:$0xf]
        %v745 = vld [vmem:[#allocation8 + $0x78] sm:$0xf]
        %v746 = vld [vmem:[#allocation8 + $0x7c] sm:$0xf]
        %v747 = vld [vmem:[#allocation8 + $0x80] sm:$0xf]
        %v748 = vld [vmem:[#allocation8 + $0x84] sm:$0xf]
        %v749 = vld [vmem:[#allocation8 + $0x88] sm:$0xf]
        %v750 = vld [vmem:[#allocation8 + $0x8c] sm:$0xf]
        %v751 = vld [vmem:[#allocation8 + $0x90] sm:$0xf]
        %v752 = vld [vmem:[#allocation8 + $0x94] sm:$0xf]
        %v753 = vld [vmem:[#allocation8 + $0x98] sm:$0xf]
        %v754 = vld [vmem:[#allocation8 + $0x9c] sm:$0xf]
        %v755 = vld [vmem:[#allocation8 + $0xa0] sm:$0xf]
        %v756 = vld [vmem:[#allocation8 + $0xa4] sm:$0xf]
        %v757 = vld [vmem:[#allocation8 + $0xa8] sm:$0xf]
        %v758 = vld [vmem:[#allocation8 + $0xac] sm:$0xf]
        %v759 = vld [vmem:[#allocation8 + $0xb0] sm:$0xf]
        %v760 = vld [vmem:[#allocation8 + $0xb4] sm:$0xf]
        %v761 = vld [vmem:[#allocation8 + $0xb8] sm:$0xf]
        %v762 = vld [vmem:[#allocation8 + $0xbc] sm:$0xf]
        %v763 = vrot.slane %v711, 7
        %v764 = vrot.slane %v712, 7
        %v765 = vrot.slane %v713, 7
        %v766 = vrot.slane %v714, 7
        %v767 = vsel %vm412, %v765, %v766
        %v768 = vsel %vm412, %v764, %v765
        %v769 = vsel %vm412, %v763, %v764
        %v770 = vsel %vm412, %v766, %v763
        %v771 = vmul.f32 %v770, %v336
        %v772 = vmul.f32 %v769, %v337
        %v773 = vmul.f32 %v768, %v338
        %v774 = vmul.f32 %v767, %v339
        %v775 = vrot.slane %v711, 1
        %v776 = vrot.slane %v712, 1
        %v777 = vrot.slane %v713, 1
        %v778 = vrot.slane %v714, 1
        %v779 = vsel %vm425, %v777, %v778
        %v780 = vsel %vm425, %v776, %v777
        %v781 = vsel %vm425, %v775, %v776
        %v782 = vsel %vm425, %v778, %v775
        %v783 = vmul.f32 %v781, %v348
        %v784 = vmul.f32 %v780, %v349
        %v785 = vmul.f32 %v779, %v350
        %v786 = vmul.f32 %v782, %v351
        %v787 = vpack.c.bf16 %v772, %v771
        %v788 = vpack.c.bf16 %v774, %v773
        %789 = vst [vmem:[#allocation2] sm:$0xff] %v787
        %790 = vst [vmem:[#allocation2 + $0x18] sm:$0xff] %v788
        %v791 = vpack.c.bf16 %v712, %v711
        %v792 = vpack.c.bf16 %v714, %v713
        %793 = vst [vmem:[#allocation2 + $0x8] sm:$0xff] %v791
        %794 = vst [vmem:[#allocation2 + $0x20] sm:$0xff] %v792
        %v795 = vpack.c.bf16 %v784, %v783
        %v796 = vpack.c.bf16 %v786, %v785
        %797 = vst [vmem:[#allocation2 + $0x10] sm:$0xff] %v795
        %798 = vst [vmem:[#allocation2 + $0x28] sm:$0xff] %v796
        %v799 = vld [vmem:[#allocation2] sm:$0xff]
        %v800 = vld [vmem:[#allocation2 + $0x8] sm:$0xff]
        %v801 = vld [vmem:[#allocation2 + $0x10] sm:$0xff]
        %v802 = vld [vmem:[#allocation2 + $0x18] sm:$0xff]
        %v803 = vld [vmem:[#allocation2 + $0x20] sm:$0xff]
        %v804 = vld [vmem:[#allocation2 + $0x28] sm:$0xff]
        %v805 = vld [vmem:[%s4] sm:$0x1]
        %v807 = vlaneseq
        %v808 = vshrl.u32 %v807, 7
        %v809 = vsub.s32 0, %v808
        %v810 = vrot.slane %v805, %v809
        %v860 = vunpack.c.l.b16 %v715
        %v861 = vunpack.c.l.b16 %v716
        %v862 = vunpack.c.l.b16 %v717
        %v863 = vunpack.c.l.b16 %v718
        %v864 = vunpack.c.l.b16 %v719
        %v865 = vunpack.c.l.b16 %v720
        %v866 = vunpack.c.l.b16 %v721
        %v867 = vunpack.c.l.b16 %v722
        %v868 = vunpack.c.l.b16 %v723
        %v869 = vunpack.c.l.b16 %v724
        %v870 = vunpack.c.l.b16 %v725
        %v871 = vunpack.c.l.b16 %v726
        %v872 = vunpack.c.l.b16 %v727
        %v873 = vunpack.c.l.b16 %v728
        %v874 = vunpack.c.l.b16 %v729
        %v875 = vunpack.c.l.b16 %v730
        %v876 = vunpack.c.l.b16 %v731
        %v877 = vunpack.c.l.b16 %v732
        %v878 = vunpack.c.l.b16 %v733
        %v879 = vunpack.c.l.b16 %v734
        %v880 = vunpack.c.l.b16 %v735
        %v881 = vunpack.c.l.b16 %v736
        %v882 = vunpack.c.l.b16 %v737
        %v883 = vunpack.c.l.b16 %v738
        %v884 = vunpack.c.l.b16 %v739
        %v885 = vunpack.c.l.b16 %v740
        %v886 = vunpack.c.l.b16 %v741
        %v887 = vunpack.c.l.b16 %v742
        %v888 = vunpack.c.l.b16 %v743
        %v889 = vunpack.c.l.b16 %v744
        %v890 = vunpack.c.l.b16 %v745
        %v891 = vunpack.c.l.b16 %v746
        %v892 = vunpack.c.l.b16 %v747
        %v893 = vunpack.c.l.b16 %v748
        %v894 = vunpack.c.l.b16 %v749
        %v895 = vunpack.c.l.b16 %v750
        %v896 = vunpack.c.l.b16 %v751
        %v897 = vunpack.c.l.b16 %v752
        %v898 = vunpack.c.l.b16 %v753
        %v899 = vunpack.c.l.b16 %v754
        %v900 = vunpack.c.l.b16 %v755
        %v901 = vunpack.c.l.b16 %v756
        %v902 = vunpack.c.l.b16 %v757
        %v903 = vunpack.c.l.b16 %v758
        %v904 = vunpack.c.l.b16 %v759
        %v905 = vunpack.c.l.b16 %v760
        %v906 = vunpack.c.l.b16 %v761
        %v907 = vunpack.c.l.b16 %v762
        %v908 = vpack.c.b16 %v861, %v860
        %v909 = vpack.c.b16 %v863, %v862
        %v910 = vpack.c.b16 %v865, %v864
        %v911 = vpack.c.b16 %v867, %v866
        %v912 = vpack.c.b16 %v869, %v868
        %v913 = vpack.c.b16 %v871, %v870
        %v914 = vpack.c.b16 %v873, %v872
        %v915 = vpack.c.b16 %v875, %v874
        %v916 = vpack.c.b16 %v877, %v876
        %v917 = vpack.c.b16 %v879, %v878
        %v918 = vpack.c.b16 %v881, %v880
        %v919 = vpack.c.b16 %v883, %v882
        %v920 = vpack.c.b16 %v885, %v884
        %v921 = vpack.c.b16 %v887, %v886
        %v922 = vpack.c.b16 %v889, %v888
        %v923 = vpack.c.b16 %v891, %v890
        %v924 = vpack.c.b16 %v893, %v892
        %v925 = vpack.c.b16 %v895, %v894
        %v926 = vpack.c.b16 %v897, %v896
        %v927 = vpack.c.b16 %v899, %v898
        %v928 = vpack.c.b16 %v901, %v900
        %v929 = vpack.c.b16 %v903, %v902
        %v930 = vpack.c.b16 %v905, %v904
        %v931 = vpack.c.b16 %v907, %v906
        %956 = vmatprep.subr.bf16.mxu0 0
        %957 = vmatpush1.bf16.msra.mxu0 %v908
        %958 = vmatprep.subr.bf16.mxu0 0
        %959 = vmatpush1.bf16.msra.mxu0 %v909
        %960 = vmatprep.subr.bf16.mxu0 0
        %961 = vmatpush1.bf16.msra.mxu0 %v910
        %962 = vmatprep.subr.bf16.mxu0 0
        %963 = vmatpush1.bf16.msra.mxu0 %v911
        %964 = vmatprep.subr.bf16.mxu0 0
        %965 = vmatpush1.bf16.msra.mxu0 %v912
        %966 = vmatprep.subr.bf16.mxu0 0
        %967 = vmatpush1.bf16.msra.mxu0 %v913
        %968 = vmatprep.subr.bf16.mxu0 0
        %969 = vmatpush1.bf16.msra.mxu0 %v914
        %970 = vmatprep.subr.bf16.mxu0 0
        %971 = vmatpush1.bf16.msra.mxu0 %v915
        %972 = vmatprep.subr.bf16.mxu0 0
        %973 = vmatpush1.bf16.msra.mxu0 %v916
        %974 = vmatprep.subr.bf16.mxu0 0
        %975 = vmatpush1.bf16.msra.mxu0 %v917
        %976 = vmatprep.subr.bf16.mxu0 0
        %977 = vmatpush1.bf16.msra.mxu0 %v918
        %978 = vmatprep.subr.bf16.mxu0 0
        %979 = vmatpush1.bf16.msra.mxu0 %v919
        %980 = vmatprep.subr.bf16.mxu0 0
        %981 = vmatpush1.bf16.msra.mxu0 %v920
        %982 = vmatprep.subr.bf16.mxu0 0
        %983 = vmatpush1.bf16.msra.mxu0 %v921
        %984 = vmatprep.subr.bf16.mxu0 0
        %985 = vmatpush1.bf16.msra.mxu0 %v922
        %986 = vmatprep.subr.bf16.mxu0 0
        %987 = vmatpush1.bf16.msra.mxu0 %v923
        %988 = vmatprep.mubr.bf16.mxu0 %v800
        %989 = vmatmul.mubr.bf16.gmra.mrb[0].mxu0 %v799
        %v990 = vpop.f32.mrb[0].mxu0
        %v991 = vadd.f32 %v810, %v990
        %v992 = vpop.f32.mrb[0].mxu0
        %v993 = vpop.f32.mrb[0].mxu0
        %v994 = vadd.f32 %v810, %v993
        %v995 = vpop.f32.mrb[0].mxu0
        %996 = vmatprep.mubr.bf16.mxu0 %v803
        %997 = vmatmul.mubr.bf16.gmra.mrb[0].mxu0 %v802
        %v998 = vpop.f32.mrb[0].mxu0
        %v999 = vadd.f32 %v810, %v998
        %v1000 = vpop.f32.mrb[0].mxu0
        %v1001 = vpop.f32.mrb[0].mxu0
        %v1002 = vadd.f32 %v810, %v1001
        %v1003 = vpop.f32.mrb[0].mxu0
        %1004 = vdwg.mxu0
        %1005 = vmatprep.subr.bf16.mxu0 0
        %1006 = vmatpush1.bf16.msra.mxu0 %v924
        %1007 = vmatprep.subr.bf16.mxu0 0
        %1008 = vmatpush1.bf16.msra.mxu0 %v925
        %1009 = vmatprep.subr.bf16.mxu0 0
        %1010 = vmatpush1.bf16.msra.mxu0 %v926
        %1011 = vmatprep.subr.bf16.mxu0 0
        %1012 = vmatpush1.bf16.msra.mxu0 %v927
        %1013 = vmatprep.subr.bf16.mxu0 0
        %1014 = vmatpush1.bf16.msra.mxu0 %v928
        %1015 = vmatprep.subr.bf16.mxu0 0
        %1016 = vmatpush1.bf16.msra.mxu0 %v929
        %1017 = vmatprep.subr.bf16.mxu0 0
        %1018 = vmatpush1.bf16.msra.mxu0 %v930
        %1019 = vmatprep.subr.bf16.mxu0 0
        %1020 = vmatpush1.bf16.msra.mxu0 %v931
        %1021 = vmatprep.subr.bf16.mxu0 0
        %1022 = vmatpush1.bf16.msra.mxu0 0
        %1023 = vmatprep.subr.bf16.mxu0 0
        %1024 = vmatpush1.bf16.msra.mxu0 0
        %1025 = vmatprep.subr.bf16.mxu0 0
        %1026 = vmatpush1.bf16.msra.mxu0 0
        %1027 = vmatprep.subr.bf16.mxu0 0
        %1028 = vmatpush1.bf16.msra.mxu0 0
        %1029 = vmatprep.subr.bf16.mxu0 0
        %1030 = vmatpush1.bf16.msra.mxu0 0
        %1031 = vmatprep.subr.bf16.mxu0 0
        %1032 = vmatpush1.bf16.msra.mxu0 0
        %1033 = vmatprep.subr.bf16.mxu0 0
        %1034 = vmatpush1.bf16.msra.mxu0 0
        %1035 = vmatprep.subr.bf16.mxu0 0
        %1036 = vmatpush1.bf16.msra.mxu0 0
        %1037 = vmatprep.mubr.bf16.mxu0 0
        %1038 = vmatmul.mubr.bf16.gmra.mrb[0].mxu0 %v801
        %v1039 = vpop.f32.mrb[0].mxu0
        %v1040 = vadd.f32 %v991, %v1039
        %v1041 = vpop.f32.mrb[0].mxu0
        %v1042 = vpop.f32.mrb[0].mxu0
        %v1043 = vadd.f32 %v994, %v1042
        %v1044 = vpop.f32.mrb[0].mxu0
        %1045 = vmatprep.mubr.bf16.mxu0 0
        %1046 = vmatmul.mubr.bf16.gmra.mrb[0].mxu0 %v804
        %v1047 = vpop.f32.mrb[0].mxu0
        %v1048 = vadd.f32 %v999, %v1047
        %v1049 = vpop.f32.mrb[0].mxu0
        %v1050 = vpop.f32.mrb[0].mxu0
        %v1051 = vadd.f32 %v1002, %v1050
        %v1052 = vpop.f32.mrb[0].mxu0
        %1053 = vdwg.mxu0
        %v1054 = vmax.f32 %v1040, 0.0
        %v1055 = vmax.f32 %v1043, 0.0
        %v1056 = vmax.f32 %v1048, 0.0
        %v1057 = vmax.f32 %v1051, 0.0
        %s1058 = scalar_lea.vmem [#allocation8], 192
        %v1059 = vld [vmem:[%s1058] sm:$0xf]
        %v1060 = vld [vmem:[%s1058 + $0x4] sm:$0xf]
        %v1061 = vld [vmem:[%s1058 + $0x8] sm:$0xf]
        %v1062 = vld [vmem:[%s1058 + $0xc] sm:$0xf]
        %v1063 = vld [vmem:[%s1058 + $0x10] sm:$0xf]
        %v1064 = vld [vmem:[%s1058 + $0x14] sm:$0xf]
        %v1065 = vld [vmem:[%s1058 + $0x18] sm:$0xf]
        %v1066 = vld [vmem:[%s1058 + $0x1c] sm:$0xf]
        %v1067 = vld [vmem:[%s1058 + $0x20] sm:$0xf]
        %v1068 = vld [vmem:[%s1058 + $0x24] sm:$0xf]
        %v1069 = vld [vmem:[%s1058 + $0x28] sm:$0xf]
        %v1070 = vld [vmem:[%s1058 + $0x2c] sm:$0xf]
        %v1071 = vld [vmem:[%s1058 + $0x30] sm:$0xf]
        %v1072 = vld [vmem:[%s1058 + $0x34] sm:$0xf]
        %v1073 = vld [vmem:[%s1058 + $0x38] sm:$0xf]
        %v1074 = vld [vmem:[%s1058 + $0x3c] sm:$0xf]
        %v1075 = vld [vmem:[%s1058 + $0x40] sm:$0xf]
        %v1076 = vld [vmem:[%s1058 + $0x44] sm:$0xf]
        %v1077 = vld [vmem:[%s1058 + $0x48] sm:$0xf]
        %v1078 = vld [vmem:[%s1058 + $0x4c] sm:$0xf]
        %v1079 = vld [vmem:[%s1058 + $0x50] sm:$0xf]
        %v1080 = vld [vmem:[%s1058 + $0x54] sm:$0xf]
        %v1081 = vld [vmem:[%s1058 + $0x58] sm:$0xf]
        %v1082 = vld [vmem:[%s1058 + $0x5c] sm:$0xf]
        %v1083 = vld [vmem:[%s1058 + $0x60] sm:$0xf]
        %v1084 = vld [vmem:[%s1058 + $0x64] sm:$0xf]
        %v1085 = vld [vmem:[%s1058 + $0x68] sm:$0xf]
        %v1086 = vld [vmem:[%s1058 + $0x6c] sm:$0xf]
        %v1087 = vld [vmem:[%s1058 + $0x70] sm:$0xf]
        %v1088 = vld [vmem:[%s1058 + $0x74] sm:$0xf]
        %v1089 = vld [vmem:[%s1058 + $0x78] sm:$0xf]
        %v1090 = vld [vmem:[%s1058 + $0x7c] sm:$0xf]
        %v1091 = vld [vmem:[%s1058 + $0x80] sm:$0xf]
        %v1092 = vld [vmem:[%s1058 + $0x84] sm:$0xf]
        %v1093 = vld [vmem:[%s1058 + $0x88] sm:$0xf]
        %v1094 = vld [vmem:[%s1058 + $0x8c] sm:$0xf]
        %v1095 = vld [vmem:[%s1058 + $0x90] sm:$0xf]
        %v1096 = vld [vmem:[%s1058 + $0x94] sm:$0xf]
        %v1097 = vld [vmem:[%s1058 + $0x98] sm:$0xf]
        %v1098 = vld [vmem:[%s1058 + $0x9c] sm:$0xf]
        %v1099 = vld [vmem:[%s1058 + $0xa0] sm:$0xf]
        %v1100 = vld [vmem:[%s1058 + $0xa4] sm:$0xf]
        %v1101 = vld [vmem:[%s1058 + $0xa8] sm:$0xf]
        %v1102 = vld [vmem:[%s1058 + $0xac] sm:$0xf]
        %v1103 = vld [vmem:[%s1058 + $0xb0] sm:$0xf]
        %v1104 = vld [vmem:[%s1058 + $0xb4] sm:$0xf]
        %v1105 = vld [vmem:[%s1058 + $0xb8] sm:$0xf]
        %v1106 = vld [vmem:[%s1058 + $0xbc] sm:$0xf]
        %v1107 = vrot.slane %v1054, 7
        %v1108 = vrot.slane %v1055, 7
        %v1109 = vrot.slane %v1056, 7
        %v1110 = vrot.slane %v1057, 7
        %v1111 = vsel %vm412, %v1109, %v1110
        %v1112 = vsel %vm412, %v1108, %v1109
        %v1113 = vsel %vm412, %v1107, %v1108
        %v1114 = vsel %vm412, %v1110, %v1107
        %v1115 = vmul.f32 %v1114, %v336
        %v1116 = vmul.f32 %v1113, %v337
        %v1117 = vmul.f32 %v1112, %v338
        %v1118 = vmul.f32 %v1111, %v339
        %v1119 = vrot.slane %v1054, 1
        %v1120 = vrot.slane %v1055, 1
        %v1121 = vrot.slane %v1056, 1
        %v1122 = vrot.slane %v1057, 1
        %v1123 = vsel %vm425, %v1121, %v1122
        %v1124 = vsel %vm425, %v1120, %v1121
        %v1125 = vsel %vm425, %v1119, %v1120
        %v1126 = vsel %vm425, %v1122, %v1119
        %v1127 = vmul.f32 %v1125, %v348
        %v1128 = vmul.f32 %v1124, %v349
        %v1129 = vmul.f32 %v1123, %v350
        %v1130 = vmul.f32 %v1126, %v351
        %v1131 = vpack.c.bf16 %v1116, %v1115
        %v1132 = vpack.c.bf16 %v1118, %v1117
        %1133 = vst [vmem:[#allocation2] sm:$0xff] %v1131
        %1134 = vst [vmem:[#allocation2 + $0x18] sm:$0xff] %v1132
        %v1135 = vpack.c.bf16 %v1055, %v1054
        %v1136 = vpack.c.bf16 %v1057, %v1056
        %1137 = vst [vmem:[#allocation2 + $0x8] sm:$0xff] %v1135
        %1138 = vst [vmem:[#allocation2 + $0x20] sm:$0xff] %v1136
        %v1139 = vpack.c.bf16 %v1128, %v1127
        %v1140 = vpack.c.bf16 %v1130, %v1129
        %1141 = vst [vmem:[#allocation2 + $0x10] sm:$0xff] %v1139
        %1142 = vst [vmem:[#allocation2 + $0x28] sm:$0xff] %v1140
        %v1143 = vld [vmem:[#allocation2] sm:$0xff]
        %v1144 = vld [vmem:[#allocation2 + $0x8] sm:$0xff]
        %v1145 = vld [vmem:[#allocation2 + $0x10] sm:$0xff]
        %v1146 = vld [vmem:[#allocation2 + $0x18] sm:$0xff]
        %v1147 = vld [vmem:[#allocation2 + $0x20] sm:$0xff]
        %v1148 = vld [vmem:[#allocation2 + $0x28] sm:$0xff]
        %s1149 = scalar_lea.vmem %s4, 1
        %v1150 = vld [vmem:[%s1149] sm:$0x1]
        %v1152 = vlaneseq
        %v1153 = vshrl.u32 %v1152, 7
        %v1154 = vsub.s32 0, %v1153
        %v1155 = vrot.slane %v1150, %v1154
        %v1205 = vunpack.c.l.b16 %v1059
        %v1206 = vunpack.c.l.b16 %v1060
        %v1207 = vunpack.c.l.b16 %v1061
        %v1208 = vunpack.c.l.b16 %v1062
        %v1209 = vunpack.c.l.b16 %v1063
        %v1210 = vunpack.c.l.b16 %v1064
        %v1211 = vunpack.c.l.b16 %v1065
        %v1212 = vunpack.c.l.b16 %v1066
        %v1213 = vunpack.c.l.b16 %v1067
        %v1214 = vunpack.c.l.b16 %v1068
        %v1215 = vunpack.c.l.b16 %v1069
        %v1216 = vunpack.c.l.b16 %v1070
        %v1217 = vunpack.c.l.b16 %v1071
        %v1218 = vunpack.c.l.b16 %v1072
        %v1219 = vunpack.c.l.b16 %v1073
        %v1220 = vunpack.c.l.b16 %v1074
        %v1221 = vunpack.c.l.b16 %v1075
        %v1222 = vunpack.c.l.b16 %v1076
        %v1223 = vunpack.c.l.b16 %v1077
        %v1224 = vunpack.c.l.b16 %v1078
        %v1225 = vunpack.c.l.b16 %v1079
        %v1226 = vunpack.c.l.b16 %v1080
        %v1227 = vunpack.c.l.b16 %v1081
        %v1228 = vunpack.c.l.b16 %v1082
        %v1229 = vunpack.c.l.b16 %v1083
        %v1230 = vunpack.c.l.b16 %v1084
        %v1231 = vunpack.c.l.b16 %v1085
        %v1232 = vunpack.c.l.b16 %v1086
        %v1233 = vunpack.c.l.b16 %v1087
        %v1234 = vunpack.c.l.b16 %v1088
        %v1235 = vunpack.c.l.b16 %v1089
        %v1236 = vunpack.c.l.b16 %v1090
        %v1237 = vunpack.c.l.b16 %v1091
        %v1238 = vunpack.c.l.b16 %v1092
        %v1239 = vunpack.c.l.b16 %v1093
        %v1240 = vunpack.c.l.b16 %v1094
        %v1241 = vunpack.c.l.b16 %v1095
        %v1242 = vunpack.c.l.b16 %v1096
        %v1243 = vunpack.c.l.b16 %v1097
        %v1244 = vunpack.c.l.b16 %v1098
        %v1245 = vunpack.c.l.b16 %v1099
        %v1246 = vunpack.c.l.b16 %v1100
        %v1247 = vunpack.c.l.b16 %v1101
        %v1248 = vunpack.c.l.b16 %v1102
        %v1249 = vunpack.c.l.b16 %v1103
        %v1250 = vunpack.c.l.b16 %v1104
        %v1251 = vunpack.c.l.b16 %v1105
        %v1252 = vunpack.c.l.b16 %v1106
        %v1253 = vpack.c.b16 %v1206, %v1205
        %v1254 = vpack.c.b16 %v1208, %v1207
        %v1255 = vpack.c.b16 %v1210, %v1209
        %v1256 = vpack.c.b16 %v1212, %v1211
        %v1257 = vpack.c.b16 %v1214, %v1213
        %v1258 = vpack.c.b16 %v1216, %v1215
        %v1259 = vpack.c.b16 %v1218, %v1217
        %v1260 = vpack.c.b16 %v1220, %v1219
        %v1261 = vpack.c.b16 %v1222, %v1221
        %v1262 = vpack.c.b16 %v1224, %v1223
        %v1263 = vpack.c.b16 %v1226, %v1225
        %v1264 = vpack.c.b16 %v1228, %v1227
        %v1265 = vpack.c.b16 %v1230, %v1229
        %v1266 = vpack.c.b16 %v1232, %v1231
        %v1267 = vpack.c.b16 %v1234, %v1233
        %v1268 = vpack.c.b16 %v1236, %v1235
        %v1269 = vpack.c.b16 %v1238, %v1237
        %v1270 = vpack.c.b16 %v1240, %v1239
        %v1271 = vpack.c.b16 %v1242, %v1241
        %v1272 = vpack.c.b16 %v1244, %v1243
        %v1273 = vpack.c.b16 %v1246, %v1245
        %v1274 = vpack.c.b16 %v1248, %v1247
        %v1275 = vpack.c.b16 %v1250, %v1249
        %v1276 = vpack.c.b16 %v1252, %v1251
        %1301 = vmatprep.subr.bf16.mxu0 0
        %1302 = vmatpush1.bf16.msra.mxu0 %v1253
        %1303 = vmatprep.subr.bf16.mxu0 0
        %1304 = vmatpush1.bf16.msra.mxu0 %v1254
        %1305 = vmatprep.subr.bf16.mxu0 0
        %1306 = vmatpush1.bf16.msra.mxu0 %v1255
        %1307 = vmatprep.subr.bf16.mxu0 0
        %1308 = vmatpush1.bf16.msra.mxu0 %v1256
        %1309 = vmatprep.subr.bf16.mxu0 0
        %1310 = vmatpush1.bf16.msra.mxu0 %v1257
        %1311 = vmatprep.subr.bf16.mxu0 0
        %1312 = vmatpush1.bf16.msra.mxu0 %v1258
        %1313 = vmatprep.subr.bf16.mxu0 0
        %1314 = vmatpush1.bf16.msra.mxu0 %v1259
        %1315 = vmatprep.subr.bf16.mxu0 0
        %1316 = vmatpush1.bf16.msra.mxu0 %v1260
        %1317 = vmatprep.subr.bf16.mxu0 0
        %1318 = vmatpush1.bf16.msra.mxu0 %v1261
        %1319 = vmatprep.subr.bf16.mxu0 0
        %1320 = vmatpush1.bf16.msra.mxu0 %v1262
        %1321 = vmatprep.subr.bf16.mxu0 0
        %1322 = vmatpush1.bf16.msra.mxu0 %v1263
        %1323 = vmatprep.subr.bf16.mxu0 0
        %1324 = vmatpush1.bf16.msra.mxu0 %v1264
        %1325 = vmatprep.subr.bf16.mxu0 0
        %1326 = vmatpush1.bf16.msra.mxu0 %v1265
        %1327 = vmatprep.subr.bf16.mxu0 0
        %1328 = vmatpush1.bf16.msra.mxu0 %v1266
        %1329 = vmatprep.subr.bf16.mxu0 0
        %1330 = vmatpush1.bf16.msra.mxu0 %v1267
        %1331 = vmatprep.subr.bf16.mxu0 0
        %1332 = vmatpush1.bf16.msra.mxu0 %v1268
        %1333 = vmatprep.mubr.bf16.mxu0 %v1144
        %1334 = vmatmul.mubr.bf16.gmra.mrb[0].mxu0 %v1143
        %v1335 = vpop.f32.mrb[0].mxu0
        %v1336 = vadd.f32 %v1155, %v1335
        %v1337 = vpop.f32.mrb[0].mxu0
        %v1338 = vpop.f32.mrb[0].mxu0
        %v1339 = vadd.f32 %v1155, %v1338
        %v1340 = vpop.f32.mrb[0].mxu0
        %1341 = vmatprep.mubr.bf16.mxu0 %v1147
        %1342 = vmatmul.mubr.bf16.gmra.mrb[0].mxu0 %v1146
        %v1343 = vpop.f32.mrb[0].mxu0
        %v1344 = vadd.f32 %v1155, %v1343
        %v1345 = vpop.f32.mrb[0].mxu0
        %v1346 = vpop.f32.mrb[0].mxu0
        %v1347 = vadd.f32 %v1155, %v1346
        %v1348 = vpop.f32.mrb[0].mxu0
        %1349 = vdwg.mxu0
        %1350 = vmatprep.subr.bf16.mxu0 0
        %1351 = vmatpush1.bf16.msra.mxu0 %v1269
        %1352 = vmatprep.subr.bf16.mxu0 0
        %1353 = vmatpush1.bf16.msra.mxu0 %v1270
        %1354 = vmatprep.subr.bf16.mxu0 0
        %1355 = vmatpush1.bf16.msra.mxu0 %v1271
        %1356 = vmatprep.subr.bf16.mxu0 0
        %1357 = vmatpush1.bf16.msra.mxu0 %v1272
        %1358 = vmatprep.subr.bf16.mxu0 0
        %1359 = vmatpush1.bf16.msra.mxu0 %v1273
        %1360 = vmatprep.subr.bf16.mxu0 0
        %1361 = vmatpush1.bf16.msra.mxu0 %v1274
        %1362 = vmatprep.subr.bf16.mxu0 0
        %1363 = vmatpush1.bf16.msra.mxu0 %v1275
        %1364 = vmatprep.subr.bf16.mxu0 0
        %1365 = vmatpush1.bf16.msra.mxu0 %v1276
        %1366 = vmatprep.subr.bf16.mxu0 0
        %1367 = vmatpush1.bf16.msra.mxu0 0
        %1368 = vmatprep.subr.bf16.mxu0 0
        %1369 = vmatpush1.bf16.msra.mxu0 0
        %1370 = vmatprep.subr.bf16.mxu0 0
        %1371 = vmatpush1.bf16.msra.mxu0 0
        %1372 = vmatprep.subr.bf16.mxu0 0
        %1373 = vmatpush1.bf16.msra.mxu0 0
        %1374 = vmatprep.subr.bf16.mxu0 0
        %1375 = vmatpush1.bf16.msra.mxu0 0
        %1376 = vmatprep.subr.bf16.mxu0 0
        %1377 = vmatpush1.bf16.msra.mxu0 0
        %1378 = vmatprep.subr.bf16.mxu0 0
        %1379 = vmatpush1.bf16.msra.mxu0 0
        %1380 = vmatprep.subr.bf16.mxu0 0
        %1381 = vmatpush1.bf16.msra.mxu0 0
        %1382 = vmatprep.mubr.bf16.mxu0 0
        %1383 = vmatmul.mubr.bf16.gmra.mrb[0].mxu0 %v1145
        %v1384 = vpop.f32.mrb[0].mxu0
        %v1385 = vadd.f32 %v1336, %v1384
        %v1386 = vpop.f32.mrb[0].mxu0
        %v1387 = vpop.f32.mrb[0].mxu0
        %v1388 = vadd.f32 %v1339, %v1387
        %v1389 = vpop.f32.mrb[0].mxu0
        %1390 = vmatprep.mubr.bf16.mxu0 0
        %1391 = vmatmul.mubr.bf16.gmra.mrb[0].mxu0 %v1148
        %v1392 = vpop.f32.mrb[0].mxu0
        %v1393 = vadd.f32 %v1344, %v1392
        %v1394 = vpop.f32.mrb[0].mxu0
        %v1395 = vpop.f32.mrb[0].mxu0
        %v1396 = vadd.f32 %v1347, %v1395
        %v1397 = vpop.f32.mrb[0].mxu0
        %1398 = vdwg.mxu0
        %v1399 = vadd.f32 %v1385, %v711
        %v1400 = vadd.f32 %v1388, %v712
        %v1401 = vadd.f32 %v1393, %v713
        %v1402 = vadd.f32 %v1396, %v714
        %v1403 = vmax.f32 %v1399, 0.0
        %v1404 = vmax.f32 %v1400, 0.0
        %v1405 = vmax.f32 %v1401, 0.0
        %v1406 = vmax.f32 %v1402, 0.0
        %s1407 = scalar_lea.vmem [#allocation8], 384
        %v1408 = vld [vmem:[%s1407] sm:$0xf]
        %v1409 = vld [vmem:[%s1407 + $0x4] sm:$0xf]
        %v1410 = vld [vmem:[%s1407 + $0x8] sm:$0xf]
        %v1411 = vld [vmem:[%s1407 + $0xc] sm:$0xf]
        %v1412 = vld [vmem:[%s1407 + $0x10] sm:$0xf]
        %v1413 = vld [vmem:[%s1407 + $0x14] sm:$0xf]
        %v1414 = vld [vmem:[%s1407 + $0x18] sm:$0xf]
        %v1415 = vld [vmem:[%s1407 + $0x1c] sm:$0xf]
        %v1416 = vld [vmem:[%s1407 + $0x20] sm:$0xf]
        %v1417 = vld [vmem:[%s1407 + $0x24] sm:$0xf]
        %v1418 = vld [vmem:[%s1407 + $0x28] sm:$0xf]
        %v1419 = vld [vmem:[%s1407 + $0x2c] sm:$0xf]
        %v1420 = vld [vmem:[%s1407 + $0x30] sm:$0xf]
        %v1421 = vld [vmem:[%s1407 + $0x34] sm:$0xf]
        %v1422 = vld [vmem:[%s1407 + $0x38] sm:$0xf]
        %v1423 = vld [vmem:[%s1407 + $0x3c] sm:$0xf]
        %v1424 = vld [vmem:[%s1407 + $0x40] sm:$0xf]
        %v1425 = vld [vmem:[%s1407 + $0x44] sm:$0xf]
        %v1426 = vld [vmem:[%s1407 + $0x48] sm:$0xf]
        %v1427 = vld [vmem:[%s1407 + $0x4c] sm:$0xf]
        %v1428 = vld [vmem:[%s1407 + $0x50] sm:$0xf]
        %v1429 = vld [vmem:[%s1407 + $0x54] sm:$0xf]
        %v1430 = vld [vmem:[%s1407 + $0x58] sm:$0xf]
        %v1431 = vld [vmem:[%s1407 + $0x5c] sm:$0xf]
        %v1432 = vld [vmem:[%s1407 + $0x60] sm:$0xf]
        %v1433 = vld [vmem:[%s1407 + $0x64] sm:$0xf]
        %v1434 = vld [vmem:[%s1407 + $0x68] sm:$0xf]
        %v1435 = vld [vmem:[%s1407 + $0x6c] sm:$0xf]
        %v1436 = vld [vmem:[%s1407 + $0x70] sm:$0xf]
        %v1437 = vld [vmem:[%s1407 + $0x74] sm:$0xf]
        %v1438 = vld [vmem:[%s1407 + $0x78] sm:$0xf]
        %v1439 = vld [vmem:[%s1407 + $0x7c] sm:$0xf]
        %v1440 = vld [vmem:[%s1407 + $0x80] sm:$0xf]
        %v1441 = vld [vmem:[%s1407 + $0x84] sm:$0xf]
        %v1442 = vld [vmem:[%s1407 + $0x88] sm:$0xf]
        %v1443 = vld [vmem:[%s1407 + $0x8c] sm:$0xf]
        %v1444 = vld [vmem:[%s1407 + $0x90] sm:$0xf]
        %v1445 = vld [vmem:[%s1407 + $0x94] sm:$0xf]
        %v1446 = vld [vmem:[%s1407 + $0x98] sm:$0xf]
        %v1447 = vld [vmem:[%s1407 + $0x9c] sm:$0xf]
        %v1448 = vld [vmem:[%s1407 + $0xa0] sm:$0xf]
        %v1449 = vld [vmem:[%s1407 + $0xa4] sm:$0xf]
        %v1450 = vld [vmem:[%s1407 + $0xa8] sm:$0xf]
        %v1451 = vld [vmem:[%s1407 + $0xac] sm:$0xf]
        %v1452 = vld [vmem:[%s1407 + $0xb0] sm:$0xf]
        %v1453 = vld [vmem:[%s1407 + $0xb4] sm:$0xf]
        %v1454 = vld [vmem:[%s1407 + $0xb8] sm:$0xf]
        %v1455 = vld [vmem:[%s1407 + $0xbc] sm:$0xf]
        %v1456 = vrot.slane %v1403, 7
        %v1457 = vrot.slane %v1404, 7
        %v1458 = vrot.slane %v1405, 7
        %v1459 = vrot.slane %v1406, 7
        %v1460 = vsel %vm412, %v1458, %v1459
        %v1461 = vsel %vm412, %v1457, %v1458
        %v1462 = vsel %vm412, %v1456, %v1457
        %v1463 = vsel %vm412, %v1459, %v1456
        %v1464 = vmul.f32 %v1463, %v336
        %v1465 = vmul.f32 %v1462, %v337
        %v1466 = vmul.f32 %v1461, %v338
        %v1467 = vmul.f32 %v1460, %v339
        %v1468 = vrot.slane %v1403, 1
        %v1469 = vrot.slane %v1404, 1
        %v1470 = vrot.slane %v1405, 1
        %v1471 = vrot.slane %v1406, 1
        %v1472 = vsel %vm425, %v1470, %v1471
        %v1473 = vsel %vm425, %v1469, %v1470
        %v1474 = vsel %vm425, %v1468, %v1469
        %v1475 = vsel %vm425, %v1471, %v1468
        %v1476 = vmul.f32 %v1474, %v348
        %v1477 = vmul.f32 %v1473, %v349
        %v1478 = vmul.f32 %v1472, %v350
        %v1479 = vmul.f32 %v1475, %v351
        %v1480 = vpack.c.bf16 %v1465, %v1464
        %v1481 = vpack.c.bf16 %v1467, %v1466
        %1482 = vst [vmem:[#allocation2] sm:$0xff] %v1480
        %1483 = vst [vmem:[#allocation2 + $0x18] sm:$0xff] %v1481
        %v1484 = vpack.c.bf16 %v1404, %v1403
        %v1485 = vpack.c.bf16 %v1406, %v1405
        %1486 = vst [vmem:[#allocation2 + $0x8] sm:$0xff] %v1484
        %1487 = vst [vmem:[#allocation2 + $0x20] sm:$0xff] %v1485
        %v1488 = vpack.c.bf16 %v1477, %v1476
        %v1489 = vpack.c.bf16 %v1479, %v1478
        %1490 = vst [vmem:[#allocation2 + $0x10] sm:$0xff] %v1488
        %1491 = vst [vmem:[#allocation2 + $0x28] sm:$0xff] %v1489
        %v1492 = vld [vmem:[#allocation2] sm:$0xff]
        %v1493 = vld [vmem:[#allocation2 + $0x8] sm:$0xff]
        %v1494 = vld [vmem:[#allocation2 + $0x10] sm:$0xff]
        %v1495 = vld [vmem:[#allocation2 + $0x18] sm:$0xff]
        %v1496 = vld [vmem:[#allocation2 + $0x20] sm:$0xff]
        %v1497 = vld [vmem:[#allocation2 + $0x28] sm:$0xff]
        %s1498 = scalar_lea.vmem %s4, 2
        %v1499 = vld [vmem:[%s1498] sm:$0x1]
        %v1501 = vlaneseq
        %v1502 = vshrl.u32 %v1501, 7
        %v1503 = vsub.s32 0, %v1502
        %v1504 = vrot.slane %v1499, %v1503
        %v1554 = vunpack.c.l.b16 %v1408
        %v1555 = vunpack.c.l.b16 %v1409
        %v1556 = vunpack.c.l.b16 %v1410
        %v1557 = vunpack.c.l.b16 %v1411
        %v1558 = vunpack.c.l.b16 %v1412
        %v1559 = vunpack.c.l.b16 %v1413
        %v1560 = vunpack.c.l.b16 %v1414
        %v1561 = vunpack.c.l.b16 %v1415
        %v1562 = vunpack.c.l.b16 %v1416
        %v1563 = vunpack.c.l.b16 %v1417
        %v1564 = vunpack.c.l.b16 %v1418
        %v1565 = vunpack.c.l.b16 %v1419
        %v1566 = vunpack.c.l.b16 %v1420
        %v1567 = vunpack.c.l.b16 %v1421
        %v1568 = vunpack.c.l.b16 %v1422
        %v1569 = vunpack.c.l.b16 %v1423
        %v1570 = vunpack.c.l.b16 %v1424
        %v1571 = vunpack.c.l.b16 %v1425
        %v1572 = vunpack.c.l.b16 %v1426
        %v1573 = vunpack.c.l.b16 %v1427
        %v1574 = vunpack.c.l.b16 %v1428
        %v1575 = vunpack.c.l.b16 %v1429
        %v1576 = vunpack.c.l.b16 %v1430
        %v1577 = vunpack.c.l.b16 %v1431
        %v1578 = vunpack.c.l.b16 %v1432
        %v1579 = vunpack.c.l.b16 %v1433
        %v1580 = vunpack.c.l.b16 %v1434
        %v1581 = vunpack.c.l.b16 %v1435
        %v1582 = vunpack.c.l.b16 %v1436
        %v1583 = vunpack.c.l.b16 %v1437
        %v1584 = vunpack.c.l.b16 %v1438
        %v1585 = vunpack.c.l.b16 %v1439
        %v1586 = vunpack.c.l.b16 %v1440
        %v1587 = vunpack.c.l.b16 %v1441
        %v1588 = vunpack.c.l.b16 %v1442
        %v1589 = vunpack.c.l.b16 %v1443
        %v1590 = vunpack.c.l.b16 %v1444
        %v1591 = vunpack.c.l.b16 %v1445
        %v1592 = vunpack.c.l.b16 %v1446
        %v1593 = vunpack.c.l.b16 %v1447
        %v1594 = vunpack.c.l.b16 %v1448
        %v1595 = vunpack.c.l.b16 %v1449
        %v1596 = vunpack.c.l.b16 %v1450
        %v1597 = vunpack.c.l.b16 %v1451
        %v1598 = vunpack.c.l.b16 %v1452
        %v1599 = vunpack.c.l.b16 %v1453
        %v1600 = vunpack.c.l.b16 %v1454
        %v1601 = vunpack.c.l.b16 %v1455
        %v1602 = vpack.c.b16 %v1555, %v1554
        %v1603 = vpack.c.b16 %v1557, %v1556
        %v1604 = vpack.c.b16 %v1559, %v1558
        %v1605 = vpack.c.b16 %v1561, %v1560
        %v1606 = vpack.c.b16 %v1563, %v1562
        %v1607 = vpack.c.b16 %v1565, %v1564
        %v1608 = vpack.c.b16 %v1567, %v1566
        %v1609 = vpack.c.b16 %v1569, %v1568
        %v1610 = vpack.c.b16 %v1571, %v1570
        %v1611 = vpack.c.b16 %v1573, %v1572
        %v1612 = vpack.c.b16 %v1575, %v1574
        %v1613 = vpack.c.b16 %v1577, %v1576
        %v1614 = vpack.c.b16 %v1579, %v1578
        %v1615 = vpack.c.b16 %v1581, %v1580
        %v1616 = vpack.c.b16 %v1583, %v1582
        %v1617 = vpack.c.b16 %v1585, %v1584
        %v1618 = vpack.c.b16 %v1587, %v1586
        %v1619 = vpack.c.b16 %v1589, %v1588
        %v1620 = vpack.c.b16 %v1591, %v1590
        %v1621 = vpack.c.b16 %v1593, %v1592
        %v1622 = vpack.c.b16 %v1595, %v1594
        %v1623 = vpack.c.b16 %v1597, %v1596
        %v1624 = vpack.c.b16 %v1599, %v1598
        %v1625 = vpack.c.b16 %v1601, %v1600
        %1650 = vmatprep.subr.bf16.mxu0 0
        %1651 = vmatpush1.bf16.msra.mxu0 %v1602
        %1652 = vmatprep.subr.bf16.mxu0 0
        %1653 = vmatpush1.bf16.msra.mxu0 %v1603
        %1654 = vmatprep.subr.bf16.mxu0 0
        %1655 = vmatpush1.bf16.msra.mxu0 %v1604
        %1656 = vmatprep.subr.bf16.mxu0 0
        %1657 = vmatpush1.bf16.msra.mxu0 %v1605
        %1658 = vmatprep.subr.bf16.mxu0 0
        %1659 = vmatpush1.bf16.msra.mxu0 %v1606
        %1660 = vmatprep.subr.bf16.mxu0 0
        %1661 = vmatpush1.bf16.msra.mxu0 %v1607
        %1662 = vmatprep.subr.bf16.mxu0 0
        %1663 = vmatpush1.bf16.msra.mxu0 %v1608
        %1664 = vmatprep.subr.bf16.mxu0 0
        %1665 = vmatpush1.bf16.msra.mxu0 %v1609
        %1666 = vmatprep.subr.bf16.mxu0 0
        %1667 = vmatpush1.bf16.msra.mxu0 %v1610
        %1668 = vmatprep.subr.bf16.mxu0 0
        %1669 = vmatpush1.bf16.msra.mxu0 %v1611
        %1670 = vmatprep.subr.bf16.mxu0 0
        %1671 = vmatpush1.bf16.msra.mxu0 %v1612
        %1672 = vmatprep.subr.bf16.mxu0 0
        %1673 = vmatpush1.bf16.msra.mxu0 %v1613
        %1674 = vmatprep.subr.bf16.mxu0 0
        %1675 = vmatpush1.bf16.msra.mxu0 %v1614
        %1676 = vmatprep.subr.bf16.mxu0 0
        %1677 = vmatpush1.bf16.msra.mxu0 %v1615
        %1678 = vmatprep.subr.bf16.mxu0 0
        %1679 = vmatpush1.bf16.msra.mxu0 %v1616
        %1680 = vmatprep.subr.bf16.mxu0 0
        %1681 = vmatpush1.bf16.msra.mxu0 %v1617
        %1682 = vmatprep.mubr.bf16.mxu0 %v1493
        %1683 = vmatmul.mubr.bf16.gmra.mrb[0].mxu0 %v1492
        %v1684 = vpop.f32.mrb[0].mxu0
        %v1685 = vadd.f32 %v1504, %v1684
        %v1686 = vpop.f32.mrb[0].mxu0
        %v1687 = vpop.f32.mrb[0].mxu0
        %v1688 = vadd.f32 %v1504, %v1687
        %v1689 = vpop.f32.mrb[0].mxu0
        %1690 = vmatprep.mubr.bf16.mxu0 %v1496
        %1691 = vmatmul.mubr.bf16.gmra.mrb[0].mxu0 %v1495
        %v1692 = vpop.f32.mrb[0].mxu0
        %v1693 = vadd.f32 %v1504, %v1692
        %v1694 = vpop.f32.mrb[0].mxu0
        %v1695 = vpop.f32.mrb[0].mxu0
        %v1696 = vadd.f32 %v1504, %v1695
        %v1697 = vpop.f32.mrb[0].mxu0
        %1698 = vdwg.mxu0
        %1699 = vmatprep.subr.bf16.mxu0 0
        %1700 = vmatpush1.bf16.msra.mxu0 %v1618
        %1701 = vmatprep.subr.bf16.mxu0 0
        %1702 = vmatpush1.bf16.msra.mxu0 %v1619
        %1703 = vmatprep.subr.bf16.mxu0 0
        %1704 = vmatpush1.bf16.msra.mxu0 %v1620
        %1705 = vmatprep.subr.bf16.mxu0 0
        %1706 = vmatpush1.bf16.msra.mxu0 %v1621
        %1707 = vmatprep.subr.bf16.mxu0 0
        %1708 = vmatpush1.bf16.msra.mxu0 %v1622
        %1709 = vmatprep.subr.bf16.mxu0 0
        %1710 = vmatpush1.bf16.msra.mxu0 %v1623
        %1711 = vmatprep.subr.bf16.mxu0 0
        %1712 = vmatpush1.bf16.msra.mxu0 %v1624
        %1713 = vmatprep.subr.bf16.mxu0 0
        %1714 = vmatpush1.bf16.msra.mxu0 %v1625
        %1715 = vmatprep.subr.bf16.mxu0 0
        %1716 = vmatpush1.bf16.msra.mxu0 0
        %1717 = vmatprep.subr.bf16.mxu0 0
        %1718 = vmatpush1.bf16.msra.mxu0 0
        %1719 = vmatprep.subr.bf16.mxu0 0
        %1720 = vmatpush1.bf16.msra.mxu0 0
        %1721 = vmatprep.subr.bf16.mxu0 0
        %1722 = vmatpush1.bf16.msra.mxu0 0
        %1723 = vmatprep.subr.bf16.mxu0 0
        %1724 = vmatpush1.bf16.msra.mxu0 0
        %1725 = vmatprep.subr.bf16.mxu0 0
        %1726 = vmatpush1.bf16.msra.mxu0 0
        %1727 = vmatprep.subr.bf16.mxu0 0
        %1728 = vmatpush1.bf16.msra.mxu0 0
        %1729 = vmatprep.subr.bf16.mxu0 0
        %1730 = vmatpush1.bf16.msra.mxu0 0
        %1731 = vmatprep.mubr.bf16.mxu0 0
        %1732 = vmatmul.mubr.bf16.gmra.mrb[0].mxu0 %v1494
        %v1733 = vpop.f32.mrb[0].mxu0
        %v1734 = vadd.f32 %v1685, %v1733
        %v1735 = vpop.f32.mrb[0].mxu0
        %v1736 = vpop.f32.mrb[0].mxu0
        %v1737 = vadd.f32 %v1688, %v1736
        %v1738 = vpop.f32.mrb[0].mxu0
        %1739 = vmatprep.mubr.bf16.mxu0 0
        %1740 = vmatmul.mubr.bf16.gmra.mrb[0].mxu0 %v1497
        %v1741 = vpop.f32.mrb[0].mxu0
        %v1742 = vadd.f32 %v1693, %v1741
        %v1743 = vpop.f32.mrb[0].mxu0
        %v1744 = vpop.f32.mrb[0].mxu0
        %v1745 = vadd.f32 %v1696, %v1744
        %v1746 = vpop.f32.mrb[0].mxu0
        %1747 = vdwg.mxu0
        %v1748 = vmax.f32 %v1734, 0.0
        %v1749 = vmax.f32 %v1737, 0.0
        %v1750 = vmax.f32 %v1742, 0.0
        %v1751 = vmax.f32 %v1745, 0.0
        %s1752 = scalar_lea.vmem [#allocation8], 576
        %v1753 = vld [vmem:[%s1752] sm:$0xf]
        %v1754 = vld [vmem:[%s1752 + $0x4] sm:$0xf]
        %v1755 = vld [vmem:[%s1752 + $0x8] sm:$0xf]
        %v1756 = vld [vmem:[%s1752 + $0xc] sm:$0xf]
        %v1757 = vld [vmem:[%s1752 + $0x10] sm:$0xf]
        %v1758 = vld [vmem:[%s1752 + $0x14] sm:$0xf]
        %v1759 = vld [vmem:[%s1752 + $0x18] sm:$0xf]
        %v1760 = vld [vmem:[%s1752 + $0x1c] sm:$0xf]
        %v1761 = vld [vmem:[%s1752 + $0x20] sm:$0xf]
        %v1762 = vld [vmem:[%s1752 + $0x24] sm:$0xf]
        %v1763 = vld [vmem:[%s1752 + $0x28] sm:$0xf]
        %v1764 = vld [vmem:[%s1752 + $0x2c] sm:$0xf]
        %v1765 = vld [vmem:[%s1752 + $0x30] sm:$0xf]
        %v1766 = vld [vmem:[%s1752 + $0x34] sm:$0xf]
        %v1767 = vld [vmem:[%s1752 + $0x38] sm:$0xf]
        %v1768 = vld [vmem:[%s1752 + $0x3c] sm:$0xf]
        %v1769 = vld [vmem:[%s1752 + $0x40] sm:$0xf]
        %v1770 = vld [vmem:[%s1752 + $0x44] sm:$0xf]
        %v1771 = vld [vmem:[%s1752 + $0x48] sm:$0xf]
        %v1772 = vld [vmem:[%s1752 + $0x4c] sm:$0xf]
        %v1773 = vld [vmem:[%s1752 + $0x50] sm:$0xf]
        %v1774 = vld [vmem:[%s1752 + $0x54] sm:$0xf]
        %v1775 = vld [vmem:[%s1752 + $0x58] sm:$0xf]
        %v1776 = vld [vmem:[%s1752 + $0x5c] sm:$0xf]
        %v1777 = vld [vmem:[%s1752 + $0x60] sm:$0xf]
        %v1778 = vld [vmem:[%s1752 + $0x64] sm:$0xf]
        %v1779 = vld [vmem:[%s1752 + $0x68] sm:$0xf]
        %v1780 = vld [vmem:[%s1752 + $0x6c] sm:$0xf]
        %v1781 = vld [vmem:[%s1752 + $0x70] sm:$0xf]
        %v1782 = vld [vmem:[%s1752 + $0x74] sm:$0xf]
        %v1783 = vld [vmem:[%s1752 + $0x78] sm:$0xf]
        %v1784 = vld [vmem:[%s1752 + $0x7c] sm:$0xf]
        %v1785 = vld [vmem:[%s1752 + $0x80] sm:$0xf]
        %v1786 = vld [vmem:[%s1752 + $0x84] sm:$0xf]
        %v1787 = vld [vmem:[%s1752 + $0x88] sm:$0xf]
        %v1788 = vld [vmem:[%s1752 + $0x8c] sm:$0xf]
        %v1789 = vld [vmem:[%s1752 + $0x90] sm:$0xf]
        %v1790 = vld [vmem:[%s1752 + $0x94] sm:$0xf]
        %v1791 = vld [vmem:[%s1752 + $0x98] sm:$0xf]
        %v1792 = vld [vmem:[%s1752 + $0x9c] sm:$0xf]
        %v1793 = vld [vmem:[%s1752 + $0xa0] sm:$0xf]
        %v1794 = vld [vmem:[%s1752 + $0xa4] sm:$0xf]
        %v1795 = vld [vmem:[%s1752 + $0xa8] sm:$0xf]
        %v1796 = vld [vmem:[%s1752 + $0xac] sm:$0xf]
        %v1797 = vld [vmem:[%s1752 + $0xb0] sm:$0xf]
        %v1798 = vld [vmem:[%s1752 + $0xb4] sm:$0xf]
        %v1799 = vld [vmem:[%s1752 + $0xb8] sm:$0xf]
        %v1800 = vld [vmem:[%s1752 + $0xbc] sm:$0xf]
        %v1801 = vrot.slane %v1748, 7
        %v1802 = vrot.slane %v1749, 7
        %v1803 = vrot.slane %v1750, 7
        %v1804 = vrot.slane %v1751, 7
        %v1805 = vsel %vm412, %v1803, %v1804
        %v1806 = vsel %vm412, %v1802, %v1803
        %v1807 = vsel %vm412, %v1801, %v1802
        %v1808 = vsel %vm412, %v1804, %v1801
        %v1809 = vmul.f32 %v1808, %v336
        %v1810 = vmul.f32 %v1807, %v337
        %v1811 = vmul.f32 %v1806, %v338
        %v1812 = vmul.f32 %v1805, %v339
        %v1813 = vrot.slane %v1748, 1
        %v1814 = vrot.slane %v1749, 1
        %v1815 = vrot.slane %v1750, 1
        %v1816 = vrot.slane %v1751, 1
        %v1817 = vsel %vm425, %v1815, %v1816
        %v1818 = vsel %vm425, %v1814, %v1815
        %v1819 = vsel %vm425, %v1813, %v1814
        %v1820 = vsel %vm425, %v1816, %v1813
        %v1821 = vmul.f32 %v1819, %v348
        %v1822 = vmul.f32 %v1818, %v349
        %v1823 = vmul.f32 %v1817, %v350
        %v1824 = vmul.f32 %v1820, %v351
        %v1825 = vpack.c.bf16 %v1810, %v1809
        %v1826 = vpack.c.bf16 %v1812, %v1811
        %1827 = vst [vmem:[#allocation2] sm:$0xff] %v1825
        %1828 = vst [vmem:[#allocation2 + $0x18] sm:$0xff] %v1826
        %v1829 = vpack.c.bf16 %v1749, %v1748
        %v1830 = vpack.c.bf16 %v1751, %v1750
        %1831 = vst [vmem:[#allocation2 + $0x8] sm:$0xff] %v1829
        %1832 = vst [vmem:[#allocation2 + $0x20] sm:$0xff] %v1830
        %v1833 = vpack.c.bf16 %v1822, %v1821
        %v1834 = vpack.c.bf16 %v1824, %v1823
        %1835 = vst [vmem:[#allocation2 + $0x10] sm:$0xff] %v1833
        %1836 = vst [vmem:[#allocation2 + $0x28] sm:$0xff] %v1834
        %v1837 = vld [vmem:[#allocation2] sm:$0xff]
        %v1838 = vld [vmem:[#allocation2 + $0x8] sm:$0xff]
        %v1839 = vld [vmem:[#allocation2 + $0x10] sm:$0xff]
        %v1840 = vld [vmem:[#allocation2 + $0x18] sm:$0xff]
        %v1841 = vld [vmem:[#allocation2 + $0x20] sm:$0xff]
        %v1842 = vld [vmem:[#allocation2 + $0x28] sm:$0xff]
        %s1843 = scalar_lea.vmem %s4, 3
        %v1844 = vld [vmem:[%s1843] sm:$0x1]
        %v1846 = vlaneseq
        %v1847 = vshrl.u32 %v1846, 7
        %v1848 = vsub.s32 0, %v1847
        %v1849 = vrot.slane %v1844, %v1848
        %v1899 = vunpack.c.l.b16 %v1753
        %v1900 = vunpack.c.l.b16 %v1754
        %v1901 = vunpack.c.l.b16 %v1755
        %v1902 = vunpack.c.l.b16 %v1756
        %v1903 = vunpack.c.l.b16 %v1757
        %v1904 = vunpack.c.l.b16 %v1758
        %v1905 = vunpack.c.l.b16 %v1759
        %v1906 = vunpack.c.l.b16 %v1760
        %v1907 = vunpack.c.l.b16 %v1761
        %v1908 = vunpack.c.l.b16 %v1762
        %v1909 = vunpack.c.l.b16 %v1763
        %v1910 = vunpack.c.l.b16 %v1764
        %v1911 = vunpack.c.l.b16 %v1765
        %v1912 = vunpack.c.l.b16 %v1766
        %v1913 = vunpack.c.l.b16 %v1767
        %v1914 = vunpack.c.l.b16 %v1768
        %v1915 = vunpack.c.l.b16 %v1769
        %v1916 = vunpack.c.l.b16 %v1770
        %v1917 = vunpack.c.l.b16 %v1771
        %v1918 = vunpack.c.l.b16 %v1772
        %v1919 = vunpack.c.l.b16 %v1773
        %v1920 = vunpack.c.l.b16 %v1774
        %v1921 = vunpack.c.l.b16 %v1775
        %v1922 = vunpack.c.l.b16 %v1776
        %v1923 = vunpack.c.l.b16 %v1777
        %v1924 = vunpack.c.l.b16 %v1778
        %v1925 = vunpack.c.l.b16 %v1779
        %v1926 = vunpack.c.l.b16 %v1780
        %v1927 = vunpack.c.l.b16 %v1781
        %v1928 = vunpack.c.l.b16 %v1782
        %v1929 = vunpack.c.l.b16 %v1783
        %v1930 = vunpack.c.l.b16 %v1784
        %v1931 = vunpack.c.l.b16 %v1785
        %v1932 = vunpack.c.l.b16 %v1786
        %v1933 = vunpack.c.l.b16 %v1787
        %v1934 = vunpack.c.l.b16 %v1788
        %v1935 = vunpack.c.l.b16 %v1789
        %v1936 = vunpack.c.l.b16 %v1790
        %v1937 = vunpack.c.l.b16 %v1791
        %v1938 = vunpack.c.l.b16 %v1792
        %v1939 = vunpack.c.l.b16 %v1793
        %v1940 = vunpack.c.l.b16 %v1794
        %v1941 = vunpack.c.l.b16 %v1795
        %v1942 = vunpack.c.l.b16 %v1796
        %v1943 = vunpack.c.l.b16 %v1797
        %v1944 = vunpack.c.l.b16 %v1798
        %v1945 = vunpack.c.l.b16 %v1799
        %v1946 = vunpack.c.l.b16 %v1800
        %v1947 = vpack.c.b16 %v1900, %v1899
        %v1948 = vpack.c.b16 %v1902, %v1901
        %v1949 = vpack.c.b16 %v1904, %v1903
        %v1950 = vpack.c.b16 %v1906, %v1905
        %v1951 = vpack.c.b16 %v1908, %v1907
        %v1952 = vpack.c.b16 %v1910, %v1909
        %v1953 = vpack.c.b16 %v1912, %v1911
        %v1954 = vpack.c.b16 %v1914, %v1913
        %v1955 = vpack.c.b16 %v1916, %v1915
        %v1956 = vpack.c.b16 %v1918, %v1917
        %v1957 = vpack.c.b16 %v1920, %v1919
        %v1958 = vpack.c.b16 %v1922, %v1921
        %v1959 = vpack.c.b16 %v1924, %v1923
        %v1960 = vpack.c.b16 %v1926, %v1925
        %v1961 = vpack.c.b16 %v1928, %v1927
        %v1962 = vpack.c.b16 %v1930, %v1929
        %v1963 = vpack.c.b16 %v1932, %v1931
        %v1964 = vpack.c.b16 %v1934, %v1933
        %v1965 = vpack.c.b16 %v1936, %v1935
        %v1966 = vpack.c.b16 %v1938, %v1937
        %v1967 = vpack.c.b16 %v1940, %v1939
        %v1968 = vpack.c.b16 %v1942, %v1941
        %v1969 = vpack.c.b16 %v1944, %v1943
        %v1970 = vpack.c.b16 %v1946, %v1945
        %1995 = vmatprep.subr.bf16.mxu0 0
        %1996 = vmatpush1.bf16.msra.mxu0 %v1947
        %1997 = vmatprep.subr.bf16.mxu0 0
        %1998 = vmatpush1.bf16.msra.mxu0 %v1948
        %1999 = vmatprep.subr.bf16.mxu0 0
        %2000 = vmatpush1.bf16.msra.mxu0 %v1949
        %2001 = vmatprep.subr.bf16.mxu0 0
        %2002 = vmatpush1.bf16.msra.mxu0 %v1950
        %2003 = vmatprep.subr.bf16.mxu0 0
        %2004 = vmatpush1.bf16.msra.mxu0 %v1951
        %2005 = vmatprep.subr.bf16.mxu0 0
        %2006 = vmatpush1.bf16.msra.mxu0 %v1952
        %2007 = vmatprep.subr.bf16.mxu0 0
        %2008 = vmatpush1.bf16.msra.mxu0 %v1953
        %2009 = vmatprep.subr.bf16.mxu0 0
        %2010 = vmatpush1.bf16.msra.mxu0 %v1954
        %2011 = vmatprep.subr.bf16.mxu0 0
        %2012 = vmatpush1.bf16.msra.mxu0 %v1955
        %2013 = vmatprep.subr.bf16.mxu0 0
        %2014 = vmatpush1.bf16.msra.mxu0 %v1956
        %2015 = vmatprep.subr.bf16.mxu0 0
        %2016 = vmatpush1.bf16.msra.mxu0 %v1957
        %2017 = vmatprep.subr.bf16.mxu0 0
        %2018 = vmatpush1.bf16.msra.mxu0 %v1958
        %2019 = vmatprep.subr.bf16.mxu0 0
        %2020 = vmatpush1.bf16.msra.mxu0 %v1959
        %2021 = vmatprep.subr.bf16.mxu0 0
        %2022 = vmatpush1.bf16.msra.mxu0 %v1960
        %2023 = vmatprep.subr.bf16.mxu0 0
        %2024 = vmatpush1.bf16.msra.mxu0 %v1961
        %2025 = vmatprep.subr.bf16.mxu0 0
        %2026 = vmatpush1.bf16.msra.mxu0 %v1962
        %2027 = vmatprep.mubr.bf16.mxu0 %v1838
        %2028 = vmatmul.mubr.bf16.gmra.mrb[0].mxu0 %v1837
        %v2029 = vpop.f32.mrb[0].mxu0
        %v2030 = vadd.f32 %v1849, %v2029
        %v2031 = vpop.f32.mrb[0].mxu0
        %v2032 = vpop.f32.mrb[0].mxu0
        %v2033 = vadd.f32 %v1849, %v2032
        %v2034 = vpop.f32.mrb[0].mxu0
        %2035 = vmatprep.mubr.bf16.mxu0 %v1841
        %2036 = vmatmul.mubr.bf16.gmra.mrb[0].mxu0 %v1840
        %v2037 = vpop.f32.mrb[0].mxu0
        %v2038 = vadd.f32 %v1849, %v2037
        %v2039 = vpop.f32.mrb[0].mxu0
        %v2040 = vpop.f32.mrb[0].mxu0
        %v2041 = vadd.f32 %v1849, %v2040
        %v2042 = vpop.f32.mrb[0].mxu0
        %2043 = vdwg.mxu0
        %2044 = vmatprep.subr.bf16.mxu0 0
        %2045 = vmatpush1.bf16.msra.mxu0 %v1963
        %2046 = vmatprep.subr.bf16.mxu0 0
        %2047 = vmatpush1.bf16.msra.mxu0 %v1964
        %2048 = vmatprep.subr.bf16.mxu0 0
        %2049 = vmatpush1.bf16.msra.mxu0 %v1965
        %2050 = vmatprep.subr.bf16.mxu0 0
        %2051 = vmatpush1.bf16.msra.mxu0 %v1966
        %2052 = vmatprep.subr.bf16.mxu0 0
        %2053 = vmatpush1.bf16.msra.mxu0 %v1967
        %2054 = vmatprep.subr.bf16.mxu0 0
        %2055 = vmatpush1.bf16.msra.mxu0 %v1968
        %2056 = vmatprep.subr.bf16.mxu0 0
        %2057 = vmatpush1.bf16.msra.mxu0 %v1969
        %2058 = vmatprep.subr.bf16.mxu0 0
        %2059 = vmatpush1.bf16.msra.mxu0 %v1970
        %2060 = vmatprep.subr.bf16.mxu0 0
        %2061 = vmatpush1.bf16.msra.mxu0 0
        %2062 = vmatprep.subr.bf16.mxu0 0
        %2063 = vmatpush1.bf16.msra.mxu0 0
        %2064 = vmatprep.subr.bf16.mxu0 0
        %2065 = vmatpush1.bf16.msra.mxu0 0
        %2066 = vmatprep.subr.bf16.mxu0 0
        %2067 = vmatpush1.bf16.msra.mxu0 0
        %2068 = vmatprep.subr.bf16.mxu0 0
        %2069 = vmatpush1.bf16.msra.mxu0 0
        %2070 = vmatprep.subr.bf16.mxu0 0
        %2071 = vmatpush1.bf16.msra.mxu0 0
        %2072 = vmatprep.subr.bf16.mxu0 0
        %2073 = vmatpush1.bf16.msra.mxu0 0
        %2074 = vmatprep.subr.bf16.mxu0 0
        %2075 = vmatpush1.bf16.msra.mxu0 0
        %2076 = vmatprep.mubr.bf16.mxu0 0
        %2077 = vmatmul.mubr.bf16.gmra.mrb[0].mxu0 %v1839
        %v2078 = vpop.f32.mrb[0].mxu0
        %v2079 = vadd.f32 %v2030, %v2078
        %v2080 = vpop.f32.mrb[0].mxu0
        %v2081 = vpop.f32.mrb[0].mxu0
        %v2082 = vadd.f32 %v2033, %v2081
        %v2083 = vpop.f32.mrb[0].mxu0
        %2084 = vmatprep.mubr.bf16.mxu0 0
        %2085 = vmatmul.mubr.bf16.gmra.mrb[0].mxu0 %v1842
        %v2086 = vpop.f32.mrb[0].mxu0
        %v2087 = vadd.f32 %v2038, %v2086
        %v2088 = vpop.f32.mrb[0].mxu0
        %v2089 = vpop.f32.mrb[0].mxu0
        %v2090 = vadd.f32 %v2041, %v2089
        %v2091 = vpop.f32.mrb[0].mxu0
        %2092 = vdwg.mxu0
        %v2093 = vadd.f32 %v2079, %v1403
        %v2094 = vadd.f32 %v2082, %v1404
        %v2095 = vadd.f32 %v2087, %v1405
        %v2096 = vadd.f32 %v2090, %v1406
        %v2097 = vmax.f32 %v2093, 0.0
        %v2098 = vmax.f32 %v2094, 0.0
        %v2099 = vmax.f32 %v2095, 0.0
        %v2100 = vmax.f32 %v2096, 0.0
        %2101 = vst [vmem:[%s271] sm:$0xff] %v2097
        %2102 = vst [vmem:[%s271 + $0x8] sm:$0xff] %v2098
        %2103 = vst [vmem:[%s271 + $0x10] sm:$0xff] %v2099
        %2104 = vst [vmem:[%s271 + $0x18] sm:$0xff] %v2100
        %s2105 = sand.u32 %s141, 1
        %s2106 = scalar_lea.sflag [#allocation5], %s2105
        %s2107 = sand.u32 %s141, 1
        %s2108 = smul.addr %s2107, 32
        %s2109 = scalar_lea.vmem [#allocation9], %s2108
        // Predicated region
        $region53: #{tpu_custom_call.1} parent=39 // pred_check
          %p2110 = pneg %p151
        $region54: #{tpu_custom_call.1} parent=39 // pred_check_branch
          %2112 = sbr.rel (%p2110) target = $region56
        $region55: #{tpu_custom_call.1} parent=39 // pred_region
          %s2113 = smul.u32 4, %s23
          %s2115 = ssub.s32 512, 512
          %2116 = vsyncadd %s2106, %s2115
          %s2117 = smul.addr %s2113, 128
          %s2118 = scalar_lea.hbm %s5, %s2117
          %s2119 = sshll.u32 %s2109, 4
          %s2120 = int_to_ptr.vmem [resolvable:$true] %s2119
          %2125 = dma.vmem_to_hbm [thread:$0]  %s2120, 512, %s2118, %s2106, 128, 128, 8
        $region56: #{tpu_custom_call.1} parent=39 // pred_fallthru
          _
      $region40: #{tpu_custom_call.1} parent=5 // pred_fallthru
        _
      %p2126 = scmp.le.s32.totalorder 2, %s18
      // Predicated region
      $region57: #{tpu_custom_call.1} parent=5 // pred_check
        %p2127 = pneg %p2126
      $region58: #{tpu_custom_call.1} parent=5 // pred_check_branch
        %2129 = sbr.rel (%p2127) target = $region60
      $region59: #{tpu_custom_call.1} parent=5 // pred_region
        %s2130 = ssub.s32 %s18, 2
        // Predicated region
        $region61: #{tpu_custom_call.1} parent=59 // pred_check
          %p2131 = pneg %p157
        $region62: #{tpu_custom_call.1} parent=59 // pred_check_branch
          %2133 = sbr.rel (%p2131) target = $region64
        $region63: #{tpu_custom_call.1} parent=59 // pred_region
          %s2134 = sand.u32 %s142, 1
          %s2135 = scalar_lea.sflag [#allocation5], %s2134
          %s2136 = sand.u32 %s142, 1
          %s2137 = smul.addr %s2136, 32
          %s2138 = scalar_lea.vmem [#allocation9], %s2137
          %2139 = dma.done %s2135, 512
        $region64: #{tpu_custom_call.1} parent=59 // pred_fallthru
          _
      $region60: #{tpu_custom_call.1} parent=5 // pred_fallthru
        _
    $region6: #{tpu_custom_call.1} parent=1 // loop_footer
      %s22 = sadd.s32 1, %s18
    $region7: #{tpu_custom_call.1} parent=1 // loop_footer_branch
      %17 = sbr.rel target = $region3
    $region8: #{tpu_custom_call.1} parent=1 // loop_exit
      _
    %2140 = vsyncpa [#allocation4], 1
    %s2141 = scalar_lea.sflag [#allocation4], 1
    %2142 = vsyncpa %s2141, 1
    %2143 = vsyncpa [#allocation7], 1
    %2144 = vsyncpa [#allocation5], 1
    %s2145 = scalar_lea.sflag [#allocation5], 1
    %2146 = vsyncpa %s2145, 1

</llo_original>
